<compile_context>
chip_gen: v7x
topology: tpu7x:2x2x1
jax: 0.10.0
libtpu: 0.0.40
codegen_flags: <defaults>
</compile_context>

<pallas_src>
import functools

import jax
import jax.numpy as jnp
from jax.experimental import pallas as pl
from jax.experimental.pallas import tpu as pltpu


def _mha_kernel(q_ref, k_ref, v_ref, mask_ref,
                wqkv_ref, bqkv_ref, wo_ref, bo_ref,
                out_ref, attn_ref,
                qh_scr, kh_scr, vh_scr,
                *, num_heads, inv_scale):
    """One grid step == one batch element."""
    x_q = q_ref[0]   # (S, H)
    x_k = k_ref[0]   # (S, H)
    x_v = v_ref[0]   # (S, H)

    # ------------------------------------------------------------------
    # Q/K/V projections straight into head-major layout (nh, S, d).
    # Contraction is over the full hidden dim H; weights are sliced only on
    # leading (major) axes (cheap), so there is no lane-axis slicing of
    # activations and no in-kernel reshape/transpose.  The 1/sqrt(d) scale
    # is folded into Q here (instead of dividing the (S, S) energy per head).
    # ------------------------------------------------------------------
    for h in range(num_heads):   # static unroll
        qh_scr[h] = (jnp.dot(x_q, wqkv_ref[0, h],
                             preferred_element_type=jnp.float32)
                     + bqkv_ref[0, h]) * inv_scale
        kh_scr[h] = (jnp.dot(x_k, wqkv_ref[1, h],
                             preferred_element_type=jnp.float32)
                     + bqkv_ref[1, h])
        vh_scr[h] = (jnp.dot(x_v, wqkv_ref[2, h],
                             preferred_element_type=jnp.float32)
                     + bqkv_ref[2, h])

    qh = qh_scr[...]   # (nh, S, d)
    kh = kh_scr[...]   # (nh, S, d)
    vh = vh_scr[...]   # (nh, S, d)

    # Head-batched score matmul: a single dot_general for all heads (no per-head
    # lane slicing, no explicit kh.T).
    energy = jnp.einsum('hqd,hkd->hqk', qh, kh,
                        preferred_element_type=jnp.float32)       # (nh, S, S)

    # Mask compare computed once per batch step and broadcast over heads.
    neg = mask_ref[0] == 0.0                                      # (S, S) bool
    energy = jnp.where(neg[None, :, :], jnp.float32(-1e10), energy)

    # Numerically-stable softmax; reciprocal goes to the (otherwise idle) EUP.
    m = jnp.max(energy, axis=-1, keepdims=True)
    e = jnp.exp(energy - m)
    s = jnp.sum(e, axis=-1, keepdims=True)
    attn = e * pl.reciprocal(s, approx=True)                      # (nh, S, S)
    attn_ref[0] = attn.astype(attn_ref.dtype)

    # Head-batched context matmul (single dot_general for all heads).
    ctx = jnp.einsum('hqk,hkd->hqd', attn, vh,
                     preferred_element_type=jnp.float32)          # (nh, S, d)

    # Output projection: per-head MXU accumulation (replaces the lane-narrow
    # concatenate); Wo is sliced along its leading/row axis, which is cheap.
    out = jnp.dot(ctx[0], wo_ref[0], preferred_element_type=jnp.float32)
    for h in range(1, num_heads):
        out = out + jnp.dot(ctx[h], wo_ref[h],
                            preferred_element_type=jnp.float32)
    out_ref[0] = (out + bo_ref[...]).astype(out_ref.dtype)


def pack_params(params, num_heads):
    """Pack torch-style (in, out) weights into head-major tensors (host side)."""
    wq, bq, wk, bk, wv, bv, wo, bo = params
    H = wq.shape[0]
    d = H // num_heads

    def w_heads(w):   # (H, H) -> (nh, H, d)
        return w.reshape(H, num_heads, d).transpose(1, 0, 2)

    def b_heads(b):   # (1, H) -> (nh, 1, d)
        return b.reshape(num_heads, d)[:, None, :]

    w_qkv = jnp.stack([w_heads(wq), w_heads(wk), w_heads(wv)])    # (3, nh, H, d)
    b_qkv = jnp.stack([b_heads(bq), b_heads(bk), b_heads(bv)])    # (3, nh, 1, d)
    wo_h = wo.reshape(num_heads, d, H)                            # (nh, d, H)
    return w_qkv, b_qkv, wo_h, bo


def multi_head_attention(query, key, value, params, *, num_heads, mask=None):
    """Pallas MHA forward. Returns (out (B,S,H), attention (B,nh,S,S))."""
    B, S, H = query.shape
    assert H % num_heads == 0
    head_dim = H // num_heads
    inv_scale = 1.0 / (float(head_dim) ** 0.5)

    if mask is None:
        mask = jnp.ones((B, S, S), dtype=jnp.float32)
    else:
        mask = mask.astype(jnp.float32)

    w_qkv, b_qkv, wo_h, bo = pack_params(params, num_heads)

    kernel = functools.partial(_mha_kernel, num_heads=num_heads,
                               inv_scale=inv_scale)

    x_spec = pl.BlockSpec((1, S, H), lambda b: (b, 0, 0))
    mask_spec = pl.BlockSpec((1, S, S), lambda b: (b, 0, 0))
    # Weight/bias blocks have constant index_maps across the grid, so they are
    # DMA'd once and revisited (one fused weight stream instead of six).
    wqkv_spec = pl.BlockSpec((3, num_heads, H, head_dim), lambda b: (0, 0, 0, 0))
    bqkv_spec = pl.BlockSpec((3, num_heads, 1, head_dim), lambda b: (0, 0, 0, 0))
    wo_spec = pl.BlockSpec((num_heads, head_dim, H), lambda b: (0, 0, 0))
    bo_spec = pl.BlockSpec((1, H), lambda b: (0, 0))

    out, attn = pl.pallas_call(
        kernel,
        out_shape=(
            jax.ShapeDtypeStruct((B, S, H), query.dtype),
            jax.ShapeDtypeStruct((B, num_heads, S, S), jnp.float32),
        ),
        grid_spec=pltpu.PrefetchScalarGridSpec(
            num_scalar_prefetch=0,
            grid=(B,),
            in_specs=[x_spec, x_spec, x_spec, mask_spec,
                      wqkv_spec, bqkv_spec, wo_spec, bo_spec],
            out_specs=[
                pl.BlockSpec((1, S, H), lambda b: (b, 0, 0)),
                pl.BlockSpec((1, num_heads, S, S), lambda b: (b, 0, 0, 0)),
            ],
            scratch_shapes=[
                pltpu.VMEM((num_heads, S, head_dim), jnp.float32),  # Q heads
                pltpu.VMEM((num_heads, S, head_dim), jnp.float32),  # K heads
                pltpu.VMEM((num_heads, S, head_dim), jnp.float32),  # V heads
            ],
        ),
        compiler_params=pltpu.CompilerParams(
            dimension_semantics=("parallel",)),
    )(query, key, value, mask, w_qkv, b_qkv, wo_h, bo)
    return out, attn


def init_params(key, hidden_dim):
    """Deterministic synthetic parameters. Weights are (in, out)."""
    ks = jax.random.split(key, 4)

    def lin(k):
        w = jax.random.normal(k, (hidden_dim, hidden_dim), jnp.float32) * 0.05
        b = jnp.zeros((1, hidden_dim), jnp.float32)
        return w, b

    wq, bq = lin(ks[0])
    wk, bk = lin(ks[1])
    wv, bv = lin(ks[2])
    wo, bo = lin(ks[3])
    return (wq, bq, wk, bk, wv, bv, wo, bo)


def _reference(query, key, value, params, num_heads, mask=None):
    """Pure-JAX reference mirroring the PyTorch forward (eval mode)."""
    wq, bq, wk, bk, wv, bv, wo, bo = params
    B, S, H = query.shape
    d = H // num_heads
    scale = jnp.sqrt(jnp.float32(d))

    def split(x):  # (B,S,H) -> (B,nh,S,d)
        return x.reshape(B, S, num_heads, d).transpose(0, 2, 1, 3)

    q = split(query @ wq + bq)
    k = split(key @ wk + bk)
    v = split(value @ wv + bv)
    energy = jnp.einsum("bhqd,bhkd->bhqk", q, k) / scale
    if mask is not None:
        energy = jnp.where(mask[:, None] == 0, -1e10, energy)
    attn = jax.nn.softmax(energy, axis=-1)
    out = jnp.einsum("bhqk,bhkd->bhqd", attn, v)
    out = out.transpose(0, 2, 1, 3).reshape(B, S, H)
    out = out @ wo + bo
    return out, attn


if __name__ == "__main__":
    B, S, H, NH = 2, 8, 32, 4

    key = jax.random.PRNGKey(0)
    k_q, k_k, k_v, k_p = jax.random.split(key, 4)
    query = jax.random.normal(k_q, (B, S, H), jnp.float32)
    key_t = jax.random.normal(k_k, (B, S, H), jnp.float32)
    value = jax.random.normal(k_v, (B, S, H), jnp.float32)

    # lower-triangular causal mask, shape (B, S, S)
    mask = jnp.tril(jnp.ones((S, S), jnp.float32))[None].repeat(B, axis=0)

    params = init_params(k_p, H)

    out, attn = multi_head_attention(query, key_t, value, params,
                                     num_heads=NH, mask=mask)
    out = jax.block_until_ready(out)
    attn = jax.block_until_ready(attn)

    ref_out, ref_attn = _reference(query, key_t, value, params, NH, mask=mask)
    assert out.shape == (B, S, H) and attn.shape == (B, NH, S, S)
    # Tolerances account for the EUP approximate reciprocal in the softmax.
    assert jnp.allclose(attn, ref_attn, atol=2e-3, rtol=2e-3)
    assert jnp.allclose(out, ref_out, atol=5e-3, rtol=5e-3)

    print("KERNEL_OK")
</pallas_src>

<mosaic_0001>
module attributes {stable_mosaic.version = 11 : i64} {
  func.func @_mha_kernel(%arg0: i32, %arg1: memref<1x8x32xf32, #tpu.memory_space<vmem>>, %arg2: memref<1x8x32xf32, #tpu.memory_space<vmem>>, %arg3: memref<1x8x32xf32, #tpu.memory_space<vmem>>, %arg4: memref<1x8x8xf32, #tpu.memory_space<vmem>>, %arg5: memref<3x4x32x8xf32, #tpu.memory_space<vmem>>, %arg6: memref<3x4x1x8xf32, #tpu.memory_space<vmem>>, %arg7: memref<4x8x32xf32, #tpu.memory_space<vmem>>, %arg8: memref<1x32xf32, #tpu.memory_space<vmem>>, %arg9: memref<1x8x32xf32, #tpu.memory_space<vmem>>, %arg10: memref<1x4x8x8xf32, #tpu.memory_space<vmem>>, %arg11: memref<4x8x8xf32, #tpu.memory_space<vmem>>, %arg12: memref<4x8x8xf32, #tpu.memory_space<vmem>>, %arg13: memref<4x8x8xf32, #tpu.memory_space<vmem>>) attributes {dimension_semantics = [#tpu.dimension_semantics<parallel>], iteration_bounds = array<i64: 2>, scalar_prefetch = 0 : i64, scratch_operands = 3 : i64, tpu.core_type = #tpu.core_type<tc>, window_params = [{transform_indices = @transform_0, window_bounds = array<i64: 1, 8, 32>}, {transform_indices = @transform_1, window_bounds = array<i64: 1, 8, 32>}, {transform_indices = @transform_2, window_bounds = array<i64: 1, 8, 32>}, {transform_indices = @transform_3, window_bounds = array<i64: 1, 8, 8>}, {pipeline_mode = #tpu.pipeline_mode<synchronous>, transform_indices = @transform_4, window_bounds = array<i64: 3, 4, 32, 8>}, {pipeline_mode = #tpu.pipeline_mode<synchronous>, transform_indices = @transform_5, window_bounds = array<i64: 3, 4, 1, 8>}, {pipeline_mode = #tpu.pipeline_mode<synchronous>, transform_indices = @transform_6, window_bounds = array<i64: 4, 8, 32>}, {pipeline_mode = #tpu.pipeline_mode<synchronous>, transform_indices = @transform_7, window_bounds = array<i64: 1, 32>}, {transform_indices = @transform_8, window_bounds = array<i64: 1, 8, 32>}, {transform_indices = @transform_9, window_bounds = array<i64: 1, 4, 8, 8>}]} {
    %c0 = arith.constant 0 : index
    %c0_0 = arith.constant 0 : index
    %c0_1 = arith.constant 0 : index
    %0 = vector.load %arg1[%c0, %c0_0, %c0_1] : memref<1x8x32xf32, #tpu.memory_space<vmem>>, vector<1x8x32xf32>
    %1 = vector.shape_cast %0 : vector<1x8x32xf32> to vector<8x32xf32>
    %c0_2 = arith.constant 0 : index
    %c0_3 = arith.constant 0 : index
    %c0_4 = arith.constant 0 : index
    %2 = vector.load %arg2[%c0_2, %c0_3, %c0_4] : memref<1x8x32xf32, #tpu.memory_space<vmem>>, vector<1x8x32xf32>
    %3 = vector.shape_cast %2 : vector<1x8x32xf32> to vector<8x32xf32>
    %c0_5 = arith.constant 0 : index
    %c0_6 = arith.constant 0 : index
    %c0_7 = arith.constant 0 : index
    %4 = vector.load %arg3[%c0_5, %c0_6, %c0_7] : memref<1x8x32xf32, #tpu.memory_space<vmem>>, vector<1x8x32xf32>
    %5 = vector.shape_cast %4 : vector<1x8x32xf32> to vector<8x32xf32>
    %c0_8 = arith.constant 0 : index
    %c0_9 = arith.constant 0 : index
    %c0_10 = arith.constant 0 : index
    %c0_11 = arith.constant 0 : index
    %6 = vector.load %arg5[%c0_8, %c0_9, %c0_10, %c0_11] : memref<3x4x32x8xf32, #tpu.memory_space<vmem>>, vector<1x1x32x8xf32>
    %7 = vector.shape_cast %6 : vector<1x1x32x8xf32> to vector<32x8xf32>
    %cst = arith.constant dense<0.000000e+00> : vector<8x8xf32>
    %8 = tpu.matmul %1, %7, %cst {dimension_numbers = #tpu.dot_dimension_numbers<[1], [0], [0], [1], [0, 0, 1, 1], [], []>} : vector<8x32xf32>, vector<32x8xf32>, vector<8x8xf32> -> vector<8x8xf32>
    %c0_12 = arith.constant 0 : index
    %c0_13 = arith.constant 0 : index
    %c0_14 = arith.constant 0 : index
    %c0_15 = arith.constant 0 : index
    %9 = vector.load %arg6[%c0_12, %c0_13, %c0_14, %c0_15] : memref<3x4x1x8xf32, #tpu.memory_space<vmem>>, vector<1x1x1x8xf32>
    %10 = vector.shape_cast %9 : vector<1x1x1x8xf32> to vector<1x8xf32>
    %11 = vector.broadcast %10 : vector<1x8xf32> to vector<8x8xf32>
    %12 = arith.addf %8, %11 : vector<8x8xf32>
    %cst_16 = arith.constant 0.353553385 : f32
    %13 = vector.broadcast %cst_16 : f32 to vector<8x8xf32>
    %14 = arith.mulf %12, %13 : vector<8x8xf32>
    %c0_17 = arith.constant 0 : index
    %c0_18 = arith.constant 0 : index
    %c0_19 = arith.constant 0 : index
    %15 = vector.load %arg11[%c0_17, %c0_18, %c0_19] : memref<4x8x8xf32, #tpu.memory_space<vmem>>, vector<1x8x8xf32>
    %16 = vector.shape_cast %15 : vector<1x8x8xf32> to vector<8x8xf32>
    %17 = vector.shape_cast %14 : vector<8x8xf32> to vector<1x8x8xf32>
    tpu.vector_store %arg11[%c0_17, %c0_18, %c0_19], %17 {strides = array<i32>} : memref<4x8x8xf32, #tpu.memory_space<vmem>>, vector<1x8x8xf32>,
    %c1 = arith.constant 1 : index
    %c0_20 = arith.constant 0 : index
    %c0_21 = arith.constant 0 : index
    %c0_22 = arith.constant 0 : index
    %18 = vector.load %arg5[%c1, %c0_20, %c0_21, %c0_22] : memref<3x4x32x8xf32, #tpu.memory_space<vmem>>, vector<1x1x32x8xf32>
    %19 = vector.shape_cast %18 : vector<1x1x32x8xf32> to vector<32x8xf32>
    %cst_23 = arith.constant dense<0.000000e+00> : vector<8x8xf32>
    %20 = tpu.matmul %3, %19, %cst_23 {dimension_numbers = #tpu.dot_dimension_numbers<[1], [0], [0], [1], [0, 0, 1, 1], [], []>} : vector<8x32xf32>, vector<32x8xf32>, vector<8x8xf32> -> vector<8x8xf32>
    %c1_24 = arith.constant 1 : index
    %c0_25 = arith.constant 0 : index
    %c0_26 = arith.constant 0 : index
    %c0_27 = arith.constant 0 : index
    %21 = vector.load %arg6[%c1_24, %c0_25, %c0_26, %c0_27] : memref<3x4x1x8xf32, #tpu.memory_space<vmem>>, vector<1x1x1x8xf32>
    %22 = vector.shape_cast %21 : vector<1x1x1x8xf32> to vector<1x8xf32>
    %23 = vector.broadcast %22 : vector<1x8xf32> to vector<8x8xf32>
    %24 = arith.addf %20, %23 : vector<8x8xf32>
    %c0_28 = arith.constant 0 : index
    %c0_29 = arith.constant 0 : index
    %c0_30 = arith.constant 0 : index
    %25 = vector.load %arg12[%c0_28, %c0_29, %c0_30] : memref<4x8x8xf32, #tpu.memory_space<vmem>>, vector<1x8x8xf32>
    %26 = vector.shape_cast %25 : vector<1x8x8xf32> to vector<8x8xf32>
    %27 = vector.shape_cast %24 : vector<8x8xf32> to vector<1x8x8xf32>
    tpu.vector_store %arg12[%c0_28, %c0_29, %c0_30], %27 {strides = array<i32>} : memref<4x8x8xf32, #tpu.memory_space<vmem>>, vector<1x8x8xf32>,
    %c2 = arith.constant 2 : index
    %c0_31 = arith.constant 0 : index
    %c0_32 = arith.constant 0 : index
    %c0_33 = arith.constant 0 : index
    %28 = vector.load %arg5[%c2, %c0_31, %c0_32, %c0_33] : memref<3x4x32x8xf32, #tpu.memory_space<vmem>>, vector<1x1x32x8xf32>
    %29 = vector.shape_cast %28 : vector<1x1x32x8xf32> to vector<32x8xf32>
    %cst_34 = arith.constant dense<0.000000e+00> : vector<8x8xf32>
    %30 = tpu.matmul %5, %29, %cst_34 {dimension_numbers = #tpu.dot_dimension_numbers<[1], [0], [0], [1], [0, 0, 1, 1], [], []>} : vector<8x32xf32>, vector<32x8xf32>, vector<8x8xf32> -> vector<8x8xf32>
    %c2_35 = arith.constant 2 : index
    %c0_36 = arith.constant 0 : index
    %c0_37 = arith.constant 0 : index
    %c0_38 = arith.constant 0 : index
    %31 = vector.load %arg6[%c2_35, %c0_36, %c0_37, %c0_38] : memref<3x4x1x8xf32, #tpu.memory_space<vmem>>, vector<1x1x1x8xf32>
    %32 = vector.shape_cast %31 : vector<1x1x1x8xf32> to vector<1x8xf32>
    %33 = vector.broadcast %32 : vector<1x8xf32> to vector<8x8xf32>
    %34 = arith.addf %30, %33 : vector<8x8xf32>
    %c0_39 = arith.constant 0 : index
    %c0_40 = arith.constant 0 : index
    %c0_41 = arith.constant 0 : index
    %35 = vector.load %arg13[%c0_39, %c0_40, %c0_41] : memref<4x8x8xf32, #tpu.memory_space<vmem>>, vector<1x8x8xf32>
    %36 = vector.shape_cast %35 : vector<1x8x8xf32> to vector<8x8xf32>
    %37 = vector.shape_cast %34 : vector<8x8xf32> to vector<1x8x8xf32>
    tpu.vector_store %arg13[%c0_39, %c0_40, %c0_41], %37 {strides = array<i32>} : memref<4x8x8xf32, #tpu.memory_space<vmem>>, vector<1x8x8xf32>,
    %c0_42 = arith.constant 0 : index
    %c1_43 = arith.constant 1 : index
    %c0_44 = arith.constant 0 : index
    %c0_45 = arith.constant 0 : index
    %38 = vector.load %arg5[%c0_42, %c1_43, %c0_44, %c0_45] : memref<3x4x32x8xf32, #tpu.memory_space<vmem>>, vector<1x1x32x8xf32>
    %39 = vector.shape_cast %38 : vector<1x1x32x8xf32> to vector<32x8xf32>
    %cst_46 = arith.constant dense<0.000000e+00> : vector<8x8xf32>
    %40 = tpu.matmul %1, %39, %cst_46 {dimension_numbers = #tpu.dot_dimension_numbers<[1], [0], [0], [1], [0, 0, 1, 1], [], []>} : vector<8x32xf32>, vector<32x8xf32>, vector<8x8xf32> -> vector<8x8xf32>
    %c0_47 = arith.constant 0 : index
    %c1_48 = arith.constant 1 : index
    %c0_49 = arith.constant 0 : index
    %c0_50 = arith.constant 0 : index
    %41 = vector.load %arg6[%c0_47, %c1_48, %c0_49, %c0_50] : memref<3x4x1x8xf32, #tpu.memory_space<vmem>>, vector<1x1x1x8xf32>
    %42 = vector.shape_cast %41 : vector<1x1x1x8xf32> to vector<1x8xf32>
    %43 = vector.broadcast %42 : vector<1x8xf32> to vector<8x8xf32>
    %44 = arith.addf %40, %43 : vector<8x8xf32>
    %cst_51 = arith.constant 0.353553385 : f32
    %45 = vector.broadcast %cst_51 : f32 to vector<8x8xf32>
    %46 = arith.mulf %44, %45 : vector<8x8xf32>
    %c1_52 = arith.constant 1 : index
    %c0_53 = arith.constant 0 : index
    %c0_54 = arith.constant 0 : index
    %47 = vector.load %arg11[%c1_52, %c0_53, %c0_54] : memref<4x8x8xf32, #tpu.memory_space<vmem>>, vector<1x8x8xf32>
    %48 = vector.shape_cast %47 : vector<1x8x8xf32> to vector<8x8xf32>
    %49 = vector.shape_cast %46 : vector<8x8xf32> to vector<1x8x8xf32>
    tpu.vector_store %arg11[%c1_52, %c0_53, %c0_54], %49 {strides = array<i32>} : memref<4x8x8xf32, #tpu.memory_space<vmem>>, vector<1x8x8xf32>,
    %c1_55 = arith.constant 1 : index
    %c1_56 = arith.constant 1 : index
    %c0_57 = arith.constant 0 : index
    %c0_58 = arith.constant 0 : index
    %50 = vector.load %arg5[%c1_55, %c1_56, %c0_57, %c0_58] : memref<3x4x32x8xf32, #tpu.memory_space<vmem>>, vector<1x1x32x8xf32>
    %51 = vector.shape_cast %50 : vector<1x1x32x8xf32> to vector<32x8xf32>
    %cst_59 = arith.constant dense<0.000000e+00> : vector<8x8xf32>
    %52 = tpu.matmul %3, %51, %cst_59 {dimension_numbers = #tpu.dot_dimension_numbers<[1], [0], [0], [1], [0, 0, 1, 1], [], []>} : vector<8x32xf32>, vector<32x8xf32>, vector<8x8xf32> -> vector<8x8xf32>
    %c1_60 = arith.constant 1 : index
    %c1_61 = arith.constant 1 : index
    %c0_62 = arith.constant 0 : index
    %c0_63 = arith.constant 0 : index
    %53 = vector.load %arg6[%c1_60, %c1_61, %c0_62, %c0_63] : memref<3x4x1x8xf32, #tpu.memory_space<vmem>>, vector<1x1x1x8xf32>
    %54 = vector.shape_cast %53 : vector<1x1x1x8xf32> to vector<1x8xf32>
    %55 = vector.broadcast %54 : vector<1x8xf32> to vector<8x8xf32>
    %56 = arith.addf %52, %55 : vector<8x8xf32>
    %c1_64 = arith.constant 1 : index
    %c0_65 = arith.constant 0 : index
    %c0_66 = arith.constant 0 : index
    %57 = vector.load %arg12[%c1_64, %c0_65, %c0_66] : memref<4x8x8xf32, #tpu.memory_space<vmem>>, vector<1x8x8xf32>
    %58 = vector.shape_cast %57 : vector<1x8x8xf32> to vector<8x8xf32>
    %59 = vector.shape_cast %56 : vector<8x8xf32> to vector<1x8x8xf32>
    tpu.vector_store %arg12[%c1_64, %c0_65, %c0_66], %59 {strides = array<i32>} : memref<4x8x8xf32, #tpu.memory_space<vmem>>, vector<1x8x8xf32>,
    %c2_67 = arith.constant 2 : index
    %c1_68 = arith.constant 1 : index
    %c0_69 = arith.constant 0 : index
    %c0_70 = arith.constant 0 : index
    %60 = vector.load %arg5[%c2_67, %c1_68, %c0_69, %c0_70] : memref<3x4x32x8xf32, #tpu.memory_space<vmem>>, vector<1x1x32x8xf32>
    %61 = vector.shape_cast %60 : vector<1x1x32x8xf32> to vector<32x8xf32>
    %cst_71 = arith.constant dense<0.000000e+00> : vector<8x8xf32>
    %62 = tpu.matmul %5, %61, %cst_71 {dimension_numbers = #tpu.dot_dimension_numbers<[1], [0], [0], [1], [0, 0, 1, 1], [], []>} : vector<8x32xf32>, vector<32x8xf32>, vector<8x8xf32> -> vector<8x8xf32>
    %c2_72 = arith.constant 2 : index
    %c1_73 = arith.constant 1 : index
    %c0_74 = arith.constant 0 : index
    %c0_75 = arith.constant 0 : index
    %63 = vector.load %arg6[%c2_72, %c1_73, %c0_74, %c0_75] : memref<3x4x1x8xf32, #tpu.memory_space<vmem>>, vector<1x1x1x8xf32>
    %64 = vector.shape_cast %63 : vector<1x1x1x8xf32> to vector<1x8xf32>
    %65 = vector.broadcast %64 : vector<1x8xf32> to vector<8x8xf32>
    %66 = arith.addf %62, %65 : vector<8x8xf32>
    %c1_76 = arith.constant 1 : index
    %c0_77 = arith.constant 0 : index
    %c0_78 = arith.constant 0 : index
    %67 = vector.load %arg13[%c1_76, %c0_77, %c0_78] : memref<4x8x8xf32, #tpu.memory_space<vmem>>, vector<1x8x8xf32>
    %68 = vector.shape_cast %67 : vector<1x8x8xf32> to vector<8x8xf32>
    %69 = vector.shape_cast %66 : vector<8x8xf32> to vector<1x8x8xf32>
    tpu.vector_store %arg13[%c1_76, %c0_77, %c0_78], %69 {strides = array<i32>} : memref<4x8x8xf32, #tpu.memory_space<vmem>>, vector<1x8x8xf32>,
    %c0_79 = arith.constant 0 : index
    %c2_80 = arith.constant 2 : index
    %c0_81 = arith.constant 0 : index
    %c0_82 = arith.constant 0 : index
    %70 = vector.load %arg5[%c0_79, %c2_80, %c0_81, %c0_82] : memref<3x4x32x8xf32, #tpu.memory_space<vmem>>, vector<1x1x32x8xf32>
    %71 = vector.shape_cast %70 : vector<1x1x32x8xf32> to vector<32x8xf32>
    %cst_83 = arith.constant dense<0.000000e+00> : vector<8x8xf32>
    %72 = tpu.matmul %1, %71, %cst_83 {dimension_numbers = #tpu.dot_dimension_numbers<[1], [0], [0], [1], [0, 0, 1, 1], [], []>} : vector<8x32xf32>, vector<32x8xf32>, vector<8x8xf32> -> vector<8x8xf32>
    %c0_84 = arith.constant 0 : index
    %c2_85 = arith.constant 2 : index
    %c0_86 = arith.constant 0 : index
    %c0_87 = arith.constant 0 : index
    %73 = vector.load %arg6[%c0_84, %c2_85, %c0_86, %c0_87] : memref<3x4x1x8xf32, #tpu.memory_space<vmem>>, vector<1x1x1x8xf32>
    %74 = vector.shape_cast %73 : vector<1x1x1x8xf32> to vector<1x8xf32>
    %75 = vector.broadcast %74 : vector<1x8xf32> to vector<8x8xf32>
    %76 = arith.addf %72, %75 : vector<8x8xf32>
    %cst_88 = arith.constant 0.353553385 : f32
    %77 = vector.broadcast %cst_88 : f32 to vector<8x8xf32>
    %78 = arith.mulf %76, %77 : vector<8x8xf32>
    %c2_89 = arith.constant 2 : index
    %c0_90 = arith.constant 0 : index
    %c0_91 = arith.constant 0 : index
    %79 = vector.load %arg11[%c2_89, %c0_90, %c0_91] : memref<4x8x8xf32, #tpu.memory_space<vmem>>, vector<1x8x8xf32>
    %80 = vector.shape_cast %79 : vector<1x8x8xf32> to vector<8x8xf32>
    %81 = vector.shape_cast %78 : vector<8x8xf32> to vector<1x8x8xf32>
    tpu.vector_store %arg11[%c2_89, %c0_90, %c0_91], %81 {strides = array<i32>} : memref<4x8x8xf32, #tpu.memory_space<vmem>>, vector<1x8x8xf32>,
    %c1_92 = arith.constant 1 : index
    %c2_93 = arith.constant 2 : index
    %c0_94 = arith.constant 0 : index
    %c0_95 = arith.constant 0 : index
    %82 = vector.load %arg5[%c1_92, %c2_93, %c0_94, %c0_95] : memref<3x4x32x8xf32, #tpu.memory_space<vmem>>, vector<1x1x32x8xf32>
    %83 = vector.shape_cast %82 : vector<1x1x32x8xf32> to vector<32x8xf32>
    %cst_96 = arith.constant dense<0.000000e+00> : vector<8x8xf32>
    %84 = tpu.matmul %3, %83, %cst_96 {dimension_numbers = #tpu.dot_dimension_numbers<[1], [0], [0], [1], [0, 0, 1, 1], [], []>} : vector<8x32xf32>, vector<32x8xf32>, vector<8x8xf32> -> vector<8x8xf32>
    %c1_97 = arith.constant 1 : index
    %c2_98 = arith.constant 2 : index
    %c0_99 = arith.constant 0 : index
    %c0_100 = arith.constant 0 : index
    %85 = vector.load %arg6[%c1_97, %c2_98, %c0_99, %c0_100] : memref<3x4x1x8xf32, #tpu.memory_space<vmem>>, vector<1x1x1x8xf32>
    %86 = vector.shape_cast %85 : vector<1x1x1x8xf32> to vector<1x8xf32>
    %87 = vector.broadcast %86 : vector<1x8xf32> to vector<8x8xf32>
    %88 = arith.addf %84, %87 : vector<8x8xf32>
    %c2_101 = arith.constant 2 : index
    %c0_102 = arith.constant 0 : index
    %c0_103 = arith.constant 0 : index
    %89 = vector.load %arg12[%c2_101, %c0_102, %c0_103] : memref<4x8x8xf32, #tpu.memory_space<vmem>>, vector<1x8x8xf32>
    %90 = vector.shape_cast %89 : vector<1x8x8xf32> to vector<8x8xf32>
    %91 = vector.shape_cast %88 : vector<8x8xf32> to vector<1x8x8xf32>
    tpu.vector_store %arg12[%c2_101, %c0_102, %c0_103], %91 {strides = array<i32>} : memref<4x8x8xf32, #tpu.memory_space<vmem>>, vector<1x8x8xf32>,
    %c2_104 = arith.constant 2 : index
    %c2_105 = arith.constant 2 : index
    %c0_106 = arith.constant 0 : index
    %c0_107 = arith.constant 0 : index
    %92 = vector.load %arg5[%c2_104, %c2_105, %c0_106, %c0_107] : memref<3x4x32x8xf32, #tpu.memory_space<vmem>>, vector<1x1x32x8xf32>
    %93 = vector.shape_cast %92 : vector<1x1x32x8xf32> to vector<32x8xf32>
    %cst_108 = arith.constant dense<0.000000e+00> : vector<8x8xf32>
    %94 = tpu.matmul %5, %93, %cst_108 {dimension_numbers = #tpu.dot_dimension_numbers<[1], [0], [0], [1], [0, 0, 1, 1], [], []>} : vector<8x32xf32>, vector<32x8xf32>, vector<8x8xf32> -> vector<8x8xf32>
    %c2_109 = arith.constant 2 : index
    %c2_110 = arith.constant 2 : index
    %c0_111 = arith.constant 0 : index
    %c0_112 = arith.constant 0 : index
    %95 = vector.load %arg6[%c2_109, %c2_110, %c0_111, %c0_112] : memref<3x4x1x8xf32, #tpu.memory_space<vmem>>, vector<1x1x1x8xf32>
    %96 = vector.shape_cast %95 : vector<1x1x1x8xf32> to vector<1x8xf32>
    %97 = vector.broadcast %96 : vector<1x8xf32> to vector<8x8xf32>
    %98 = arith.addf %94, %97 : vector<8x8xf32>
    %c2_113 = arith.constant 2 : index
    %c0_114 = arith.constant 0 : index
    %c0_115 = arith.constant 0 : index
    %99 = vector.load %arg13[%c2_113, %c0_114, %c0_115] : memref<4x8x8xf32, #tpu.memory_space<vmem>>, vector<1x8x8xf32>
    %100 = vector.shape_cast %99 : vector<1x8x8xf32> to vector<8x8xf32>
    %101 = vector.shape_cast %98 : vector<8x8xf32> to vector<1x8x8xf32>
    tpu.vector_store %arg13[%c2_113, %c0_114, %c0_115], %101 {strides = array<i32>} : memref<4x8x8xf32, #tpu.memory_space<vmem>>, vector<1x8x8xf32>,
    %c0_116 = arith.constant 0 : index
    %c3 = arith.constant 3 : index
    %c0_117 = arith.constant 0 : index
    %c0_118 = arith.constant 0 : index
    %102 = vector.load %arg5[%c0_116, %c3, %c0_117, %c0_118] : memref<3x4x32x8xf32, #tpu.memory_space<vmem>>, vector<1x1x32x8xf32>
    %103 = vector.shape_cast %102 : vector<1x1x32x8xf32> to vector<32x8xf32>
    %cst_119 = arith.constant dense<0.000000e+00> : vector<8x8xf32>
    %104 = tpu.matmul %1, %103, %cst_119 {dimension_numbers = #tpu.dot_dimension_numbers<[1], [0], [0], [1], [0, 0, 1, 1], [], []>} : vector<8x32xf32>, vector<32x8xf32>, vector<8x8xf32> -> vector<8x8xf32>
    %c0_120 = arith.constant 0 : index
    %c3_121 = arith.constant 3 : index
    %c0_122 = arith.constant 0 : index
    %c0_123 = arith.constant 0 : index
    %105 = vector.load %arg6[%c0_120, %c3_121, %c0_122, %c0_123] : memref<3x4x1x8xf32, #tpu.memory_space<vmem>>, vector<1x1x1x8xf32>
    %106 = vector.shape_cast %105 : vector<1x1x1x8xf32> to vector<1x8xf32>
    %107 = vector.broadcast %106 : vector<1x8xf32> to vector<8x8xf32>
    %108 = arith.addf %104, %107 : vector<8x8xf32>
    %cst_124 = arith.constant 0.353553385 : f32
    %109 = vector.broadcast %cst_124 : f32 to vector<8x8xf32>
    %110 = arith.mulf %108, %109 : vector<8x8xf32>
    %c3_125 = arith.constant 3 : index
    %c0_126 = arith.constant 0 : index
    %c0_127 = arith.constant 0 : index
    %111 = vector.load %arg11[%c3_125, %c0_126, %c0_127] : memref<4x8x8xf32, #tpu.memory_space<vmem>>, vector<1x8x8xf32>
    %112 = vector.shape_cast %111 : vector<1x8x8xf32> to vector<8x8xf32>
    %113 = vector.shape_cast %110 : vector<8x8xf32> to vector<1x8x8xf32>
    tpu.vector_store %arg11[%c3_125, %c0_126, %c0_127], %113 {strides = array<i32>} : memref<4x8x8xf32, #tpu.memory_space<vmem>>, vector<1x8x8xf32>,
    %c1_128 = arith.constant 1 : index
    %c3_129 = arith.constant 3 : index
    %c0_130 = arith.constant 0 : index
    %c0_131 = arith.constant 0 : index
    %114 = vector.load %arg5[%c1_128, %c3_129, %c0_130, %c0_131] : memref<3x4x32x8xf32, #tpu.memory_space<vmem>>, vector<1x1x32x8xf32>
    %115 = vector.shape_cast %114 : vector<1x1x32x8xf32> to vector<32x8xf32>
    %cst_132 = arith.constant dense<0.000000e+00> : vector<8x8xf32>
    %116 = tpu.matmul %3, %115, %cst_132 {dimension_numbers = #tpu.dot_dimension_numbers<[1], [0], [0], [1], [0, 0, 1, 1], [], []>} : vector<8x32xf32>, vector<32x8xf32>, vector<8x8xf32> -> vector<8x8xf32>
    %c1_133 = arith.constant 1 : index
    %c3_134 = arith.constant 3 : index
    %c0_135 = arith.constant 0 : index
    %c0_136 = arith.constant 0 : index
    %117 = vector.load %arg6[%c1_133, %c3_134, %c0_135, %c0_136] : memref<3x4x1x8xf32, #tpu.memory_space<vmem>>, vector<1x1x1x8xf32>
    %118 = vector.shape_cast %117 : vector<1x1x1x8xf32> to vector<1x8xf32>
    %119 = vector.broadcast %118 : vector<1x8xf32> to vector<8x8xf32>
    %120 = arith.addf %116, %119 : vector<8x8xf32>
    %c3_137 = arith.constant 3 : index
    %c0_138 = arith.constant 0 : index
    %c0_139 = arith.constant 0 : index
    %121 = vector.load %arg12[%c3_137, %c0_138, %c0_139] : memref<4x8x8xf32, #tpu.memory_space<vmem>>, vector<1x8x8xf32>
    %122 = vector.shape_cast %121 : vector<1x8x8xf32> to vector<8x8xf32>
    %123 = vector.shape_cast %120 : vector<8x8xf32> to vector<1x8x8xf32>
    tpu.vector_store %arg12[%c3_137, %c0_138, %c0_139], %123 {strides = array<i32>} : memref<4x8x8xf32, #tpu.memory_space<vmem>>, vector<1x8x8xf32>,
    %c2_140 = arith.constant 2 : index
    %c3_141 = arith.constant 3 : index
    %c0_142 = arith.constant 0 : index
    %c0_143 = arith.constant 0 : index
    %124 = vector.load %arg5[%c2_140, %c3_141, %c0_142, %c0_143] : memref<3x4x32x8xf32, #tpu.memory_space<vmem>>, vector<1x1x32x8xf32>
    %125 = vector.shape_cast %124 : vector<1x1x32x8xf32> to vector<32x8xf32>
    %cst_144 = arith.constant dense<0.000000e+00> : vector<8x8xf32>
    %126 = tpu.matmul %5, %125, %cst_144 {dimension_numbers = #tpu.dot_dimension_numbers<[1], [0], [0], [1], [0, 0, 1, 1], [], []>} : vector<8x32xf32>, vector<32x8xf32>, vector<8x8xf32> -> vector<8x8xf32>
    %c2_145 = arith.constant 2 : index
    %c3_146 = arith.constant 3 : index
    %c0_147 = arith.constant 0 : index
    %c0_148 = arith.constant 0 : index
    %127 = vector.load %arg6[%c2_145, %c3_146, %c0_147, %c0_148] : memref<3x4x1x8xf32, #tpu.memory_space<vmem>>, vector<1x1x1x8xf32>
    %128 = vector.shape_cast %127 : vector<1x1x1x8xf32> to vector<1x8xf32>
    %129 = vector.broadcast %128 : vector<1x8xf32> to vector<8x8xf32>
    %130 = arith.addf %126, %129 : vector<8x8xf32>
    %c3_149 = arith.constant 3 : index
    %c0_150 = arith.constant 0 : index
    %c0_151 = arith.constant 0 : index
    %131 = vector.load %arg13[%c3_149, %c0_150, %c0_151] : memref<4x8x8xf32, #tpu.memory_space<vmem>>, vector<1x8x8xf32>
    %132 = vector.shape_cast %131 : vector<1x8x8xf32> to vector<8x8xf32>
    %133 = vector.shape_cast %130 : vector<8x8xf32> to vector<1x8x8xf32>
    tpu.vector_store %arg13[%c3_149, %c0_150, %c0_151], %133 {strides = array<i32>} : memref<4x8x8xf32, #tpu.memory_space<vmem>>, vector<1x8x8xf32>,
    %c0_152 = arith.constant 0 : index
    %c0_153 = arith.constant 0 : index
    %c0_154 = arith.constant 0 : index
    %134 = vector.load %arg11[%c0_152, %c0_153, %c0_154] : memref<4x8x8xf32, #tpu.memory_space<vmem>>, vector<4x8x8xf32>
    %c0_155 = arith.constant 0 : index
    %c0_156 = arith.constant 0 : index
    %c0_157 = arith.constant 0 : index
    %135 = vector.load %arg12[%c0_155, %c0_156, %c0_157] : memref<4x8x8xf32, #tpu.memory_space<vmem>>, vector<4x8x8xf32>
    %c0_158 = arith.constant 0 : index
    %c0_159 = arith.constant 0 : index
    %c0_160 = arith.constant 0 : index
    %136 = vector.load %arg13[%c0_158, %c0_159, %c0_160] : memref<4x8x8xf32, #tpu.memory_space<vmem>>, vector<4x8x8xf32>
    "tpu.trace_start"() <{level = 10 : i32, message = "hqd,hkd->hqk"}> : () -> ()
    %cst_161 = arith.constant dense<0.000000e+00> : vector<4x8x8xf32>
    %137 = tpu.matmul %134, %135, %cst_161 {dimension_numbers = #tpu.dot_dimension_numbers<[2], [2], [1], [1], [0, 0, 0, 1, 1, 1], [0], [0]>} : vector<4x8x8xf32>, vector<4x8x8xf32>, vector<4x8x8xf32> -> vector<4x8x8xf32>
    "tpu.trace_stop"() : () -> ()
    %c0_162 = arith.constant 0 : index
    %c0_163 = arith.constant 0 : index
    %c0_164 = arith.constant 0 : index
    %138 = vector.load %arg4[%c0_162, %c0_163, %c0_164] : memref<1x8x8xf32, #tpu.memory_space<vmem>>, vector<1x8x8xf32>
    %139 = vector.shape_cast %138 : vector<1x8x8xf32> to vector<8x8xf32>
    %cst_165 = arith.constant 0.000000e+00 : f32
    %140 = vector.broadcast %cst_165 : f32 to vector<8x8xf32>
    %141 = arith.cmpf oeq, %139, %140 : vector<8x8xf32>
    %142 = vector.shape_cast %141 : vector<8x8xi1> to vector<1x8x8xi1>
    %cst_166 = arith.constant -1.000000e+10 : f32
    %143 = vector.shape_cast %142 : vector<1x8x8xi1> to vector<1x8x8xi1>
    %144 = vector.broadcast %143 : vector<1x8x8xi1> to vector<4x8x8xi1>
    %145 = vector.broadcast %cst_166 : f32 to vector<4x8x8xf32>
    %146 = arith.select %144, %145, %137 : vector<4x8x8xi1>, vector<4x8x8xf32>
    %cst_167 = arith.constant dense<0xFF800000> : vector<4x8xf32>
    %147 = vector.multi_reduction <maximumf>, %146, %cst_167 [2] : vector<4x8x8xf32> to vector<4x8xf32>
    %148 = vector.shape_cast %147 : vector<4x8xf32> to vector<4x8x1xf32>
    %149 = vector.broadcast %148 : vector<4x8x1xf32> to vector<4x8x8xf32>
    %150 = arith.subf %146, %149 : vector<4x8x8xf32>
    %151 = math.exp %150 : vector<4x8x8xf32>
    %cst_168 = arith.constant dense<0.000000e+00> : vector<4x8xf32>
    %152 = vector.multi_reduction <add>, %151, %cst_168 [2] : vector<4x8x8xf32> to vector<4x8xf32>
    %153 = vector.shape_cast %152 : vector<4x8xf32> to vector<4x8x1xf32>
    %154 = tpu.reciprocal %153 {approx = true} : vector<4x8x1xf32> -> vector<4x8x1xf32>
    %155 = vector.broadcast %154 : vector<4x8x1xf32> to vector<4x8x8xf32>
    %156 = arith.mulf %151, %155 : vector<4x8x8xf32>
    %c0_169 = arith.constant 0 : index
    %c0_170 = arith.constant 0 : index
    %c0_171 = arith.constant 0 : index
    %c0_172 = arith.constant 0 : index
    %157 = vector.load %arg10[%c0_169, %c0_170, %c0_171, %c0_172] : memref<1x4x8x8xf32, #tpu.memory_space<vmem>>, vector<1x4x8x8xf32>
    %158 = vector.shape_cast %157 : vector<1x4x8x8xf32> to vector<4x8x8xf32>
    %159 = vector.shape_cast %156 : vector<4x8x8xf32> to vector<1x4x8x8xf32>
    tpu.vector_store %arg10[%c0_169, %c0_170, %c0_171, %c0_172], %159 {strides = array<i32>} : memref<1x4x8x8xf32, #tpu.memory_space<vmem>>, vector<1x4x8x8xf32>,
    "tpu.trace_start"() <{level = 10 : i32, message = "hqk,hkd->hqd"}> : () -> ()
    %cst_173 = arith.constant dense<0.000000e+00> : vector<4x8x8xf32>
    %160 = tpu.matmul %156, %136, %cst_173 {dimension_numbers = #tpu.dot_dimension_numbers<[2], [1], [1], [2], [0, 0, 0, 1, 1, 2], [0], [0]>} : vector<4x8x8xf32>, vector<4x8x8xf32>, vector<4x8x8xf32> -> vector<4x8x8xf32>
    "tpu.trace_stop"() : () -> ()
    %161 = vector.extract_strided_slice %160 {offsets = [0, 0, 0], sizes = [1, 8, 8], strides = [1, 1, 1]} : vector<4x8x8xf32> to vector<1x8x8xf32>
    %162 = vector.shape_cast %161 : vector<1x8x8xf32> to vector<8x8xf32>
    %c0_174 = arith.constant 0 : index
    %c0_175 = arith.constant 0 : index
    %c0_176 = arith.constant 0 : index
    %163 = vector.load %arg7[%c0_174, %c0_175, %c0_176] : memref<4x8x32xf32, #tpu.memory_space<vmem>>, vector<1x8x32xf32>
    %164 = vector.shape_cast %163 : vector<1x8x32xf32> to vector<8x32xf32>
    %cst_177 = arith.constant dense<0.000000e+00> : vector<8x32xf32>
    %165 = tpu.matmul %162, %164, %cst_177 {dimension_numbers = #tpu.dot_dimension_numbers<[1], [0], [0], [1], [0, 0, 1, 1], [], []>} : vector<8x8xf32>, vector<8x32xf32>, vector<8x32xf32> -> vector<8x32xf32>
    %166 = vector.extract_strided_slice %160 {offsets = [1, 0, 0], sizes = [1, 8, 8], strides = [1, 1, 1]} : vector<4x8x8xf32> to vector<1x8x8xf32>
    %167 = vector.shape_cast %166 : vector<1x8x8xf32> to vector<8x8xf32>
    %c1_178 = arith.constant 1 : index
    %c0_179 = arith.constant 0 : index
    %c0_180 = arith.constant 0 : index
    %168 = vector.load %arg7[%c1_178, %c0_179, %c0_180] : memref<4x8x32xf32, #tpu.memory_space<vmem>>, vector<1x8x32xf32>
    %169 = vector.shape_cast %168 : vector<1x8x32xf32> to vector<8x32xf32>
    %cst_181 = arith.constant dense<0.000000e+00> : vector<8x32xf32>
    %170 = tpu.matmul %167, %169, %cst_181 {dimension_numbers = #tpu.dot_dimension_numbers<[1], [0], [0], [1], [0, 0, 1, 1], [], []>} : vector<8x8xf32>, vector<8x32xf32>, vector<8x32xf32> -> vector<8x32xf32>
    %171 = arith.addf %165, %170 : vector<8x32xf32>
    %172 = vector.extract_strided_slice %160 {offsets = [2, 0, 0], sizes = [1, 8, 8], strides = [1, 1, 1]} : vector<4x8x8xf32> to vector<1x8x8xf32>
    %173 = vector.shape_cast %172 : vector<1x8x8xf32> to vector<8x8xf32>
    %c2_182 = arith.constant 2 : index
    %c0_183 = arith.constant 0 : index
    %c0_184 = arith.constant 0 : index
    %174 = vector.load %arg7[%c2_182, %c0_183, %c0_184] : memref<4x8x32xf32, #tpu.memory_space<vmem>>, vector<1x8x32xf32>
    %175 = vector.shape_cast %174 : vector<1x8x32xf32> to vector<8x32xf32>
    %cst_185 = arith.constant dense<0.000000e+00> : vector<8x32xf32>
    %176 = tpu.matmul %173, %175, %cst_185 {dimension_numbers = #tpu.dot_dimension_numbers<[1], [0], [0], [1], [0, 0, 1, 1], [], []>} : vector<8x8xf32>, vector<8x32xf32>, vector<8x32xf32> -> vector<8x32xf32>
    %177 = arith.addf %171, %176 : vector<8x32xf32>
    %178 = vector.extract_strided_slice %160 {offsets = [3, 0, 0], sizes = [1, 8, 8], strides = [1, 1, 1]} : vector<4x8x8xf32> to vector<1x8x8xf32>
    %179 = vector.shape_cast %178 : vector<1x8x8xf32> to vector<8x8xf32>
    %c3_186 = arith.constant 3 : index
    %c0_187 = arith.constant 0 : index
    %c0_188 = arith.constant 0 : index
    %180 = vector.load %arg7[%c3_186, %c0_187, %c0_188] : memref<4x8x32xf32, #tpu.memory_space<vmem>>, vector<1x8x32xf32>
    %181 = vector.shape_cast %180 : vector<1x8x32xf32> to vector<8x32xf32>
    %cst_189 = arith.constant dense<0.000000e+00> : vector<8x32xf32>
    %182 = tpu.matmul %179, %181, %cst_189 {dimension_numbers = #tpu.dot_dimension_numbers<[1], [0], [0], [1], [0, 0, 1, 1], [], []>} : vector<8x8xf32>, vector<8x32xf32>, vector<8x32xf32> -> vector<8x32xf32>
    %183 = arith.addf %177, %182 : vector<8x32xf32>
    %c0_190 = arith.constant 0 : index
    %c0_191 = arith.constant 0 : index
    %184 = vector.load %arg8[%c0_190, %c0_191] : memref<1x32xf32, #tpu.memory_space<vmem>>, vector<1x32xf32>
    %185 = vector.broadcast %184 : vector<1x32xf32> to vector<8x32xf32>
    %186 = arith.addf %183, %185 : vector<8x32xf32>
    %c0_192 = arith.constant 0 : index
    %c0_193 = arith.constant 0 : index
    %c0_194 = arith.constant 0 : index
    %187 = vector.load %arg9[%c0_192, %c0_193, %c0_194] : memref<1x8x32xf32, #tpu.memory_space<vmem>>, vector<1x8x32xf32>
    %188 = vector.shape_cast %187 : vector<1x8x32xf32> to vector<8x32xf32>
    %189 = vector.shape_cast %186 : vector<8x32xf32> to vector<1x8x32xf32>
    tpu.vector_store %arg9[%c0_192, %c0_193, %c0_194], %189 {strides = array<i32>} : memref<1x8x32xf32, #tpu.memory_space<vmem>>, vector<1x8x32xf32>,
    return
  }
  func.func @transform_0(%arg0: i32) -> (i32, i32, i32) {
    %c0_i32 = arith.constant 0 : i32
    %c0_i32_0 = arith.constant 0 : i32
    %c0_i32_1 = arith.constant 0 : i32
    return %arg0, %c0_i32, %c0_i32_0 : i32, i32, i32
  }
  func.func @transform_1(%arg0: i32) -> (i32, i32, i32) {
    %c0_i32 = arith.constant 0 : i32
    %c0_i32_0 = arith.constant 0 : i32
    %c0_i32_1 = arith.constant 0 : i32
    return %arg0, %c0_i32, %c0_i32_0 : i32, i32, i32
  }
  func.func @transform_2(%arg0: i32) -> (i32, i32, i32) {
    %c0_i32 = arith.constant 0 : i32
    %c0_i32_0 = arith.constant 0 : i32
    %c0_i32_1 = arith.constant 0 : i32
    return %arg0, %c0_i32, %c0_i32_0 : i32, i32, i32
  }
  func.func @transform_3(%arg0: i32) -> (i32, i32, i32) {
    %c0_i32 = arith.constant 0 : i32
    %c0_i32_0 = arith.constant 0 : i32
    %c0_i32_1 = arith.constant 0 : i32
    return %arg0, %c0_i32, %c0_i32_0 : i32, i32, i32
  }
  func.func @transform_4(%arg0: i32) -> (i32, i32, i32, i32) {
    %c0_i32 = arith.constant 0 : i32
    %c0_i32_0 = arith.constant 0 : i32
    %c0_i32_1 = arith.constant 0 : i32
    %c0_i32_2 = arith.constant 0 : i32
    %c0_i32_3 = arith.constant 0 : i32
    return %c0_i32, %c0_i32_0, %c0_i32_1, %c0_i32_2 : i32, i32, i32, i32
  }
  func.func @transform_5(%arg0: i32) -> (i32, i32, i32, i32) {
    %c0_i32 = arith.constant 0 : i32
    %c0_i32_0 = arith.constant 0 : i32
    %c0_i32_1 = arith.constant 0 : i32
    %c0_i32_2 = arith.constant 0 : i32
    %c0_i32_3 = arith.constant 0 : i32
    return %c0_i32, %c0_i32_0, %c0_i32_1, %c0_i32_2 : i32, i32, i32, i32
  }
  func.func @transform_6(%arg0: i32) -> (i32, i32, i32) {
    %c0_i32 = arith.constant 0 : i32
    %c0_i32_0 = arith.constant 0 : i32
    %c0_i32_1 = arith.constant 0 : i32
    %c0_i32_2 = arith.constant 0 : i32
    return %c0_i32, %c0_i32_0, %c0_i32_1 : i32, i32, i32
  }
  func.func @transform_7(%arg0: i32) -> (i32, i32) {
    %c0_i32 = arith.constant 0 : i32
    %c0_i32_0 = arith.constant 0 : i32
    %c0_i32_1 = arith.constant 0 : i32
    return %c0_i32, %c0_i32_0 : i32, i32
  }
  func.func @transform_8(%arg0: i32) -> (i32, i32, i32) {
    %c0_i32 = arith.constant 0 : i32
    %c0_i32_0 = arith.constant 0 : i32
    %c0_i32_1 = arith.constant 0 : i32
    return %arg0, %c0_i32, %c0_i32_0 : i32, i32, i32
  }
  func.func @transform_9(%arg0: i32) -> (i32, i32, i32, i32) {
    %c0_i32 = arith.constant 0 : i32
    %c0_i32_0 = arith.constant 0 : i32
    %c0_i32_1 = arith.constant 0 : i32
    %c0_i32_2 = arith.constant 0 : i32
    return %arg0, %c0_i32, %c0_i32_0, %c0_i32_1 : i32, i32, i32, i32
  }
}

</mosaic_0001>

<llo_original>
// kernel: tpu_custom_call.1
$region0: #{tpu_custom_call.1}
  #allocation0 [shape = 'u32[]', space=smem, size = 0x4, offset = 0x4, fixed_abs, tag = 'smem constant byte address 0x4 - core index']
  #allocation1 [shape = 'u32[144,128]{1,0:T(1,128)}', space=vmem, size = 0x12000, scoped, tag = 'internal scratch']
  #allocation2 [shape = 'f32[4,8,8]{2,1,0:T(8,128)}', space=vmem, size = 0x4000, scoped, tag = 'scratch operand']
  #allocation3 [shape = 'f32[4,8,8]{2,1,0:T(8,128)}', space=vmem, size = 0x4000, scoped, tag = 'scratch operand']
  #allocation4 [shape = 'f32[4,8,8]{2,1,0:T(8,128)}', space=vmem, size = 0x4000, scoped, tag = 'scratch operand']
  %s0 = inlined_call_operand.vmem [shape: f32[2,8,32], index: 0, kind: input, shape index: {}]
  %s1 = inlined_call_operand.vmem [shape: f32[2,8,32], index: 1, kind: input, shape index: {}]
  %s2 = inlined_call_operand.vmem [shape: f32[2,8,32], index: 2, kind: input, shape index: {}]
  %s3 = inlined_call_operand.vmem [shape: f32[2,8,8], index: 3, kind: input, shape index: {}]
  %s4 = inlined_call_operand.vmem [shape: f32[3,4,32,8], index: 4, kind: input, shape index: {}]
  %s5 = inlined_call_operand.vmem [shape: f32[3,4,1,8], index: 5, kind: input, shape index: {}]
  %s6 = inlined_call_operand.vmem [shape: f32[4,8,32], index: 6, kind: input, shape index: {}]
  %s7 = inlined_call_operand.vmem [shape: f32[1,32], index: 7, kind: input, shape index: {}]
  %s8 = inlined_call_operand.hbm [shape: f32[2,8,32], index: 8, kind: output, shape index: {0}]
  %s9 = inlined_call_operand.hbm [shape: f32[2,4,8,8], index: 9, kind: output, shape index: {1}]
  %10 = xla_tuple %s8, %s9
  %s11 = sld [smem:[#allocation0]]
  $region73: #{tpu_custom_call.1} parent=0
    _
  %s13 = ssub.s32 1, %s11
  %s14 = scalar_select 0, %s13, %s11
  $region1: #{tpu_custom_call.1} parent=0
    #allocation5 [shape = 'u8[8192]{0}', space=vmem, size = 0x2000, scoped, tag = 'output window, operand 0']
    #allocation6 [shape = 's32[2]{0}', space=sflag, size = 0x8, scoped, tag = 'scoped memory for tpu_custom_call.1']
    #allocation7 [shape = 'u8[32768]{0}', space=vmem, size = 0x8000, scoped, tag = 'output window, operand 1']
    #allocation8 [shape = 's32[2]{0}', space=sflag, size = 0x8, scoped, tag = 'scoped memory for tpu_custom_call.1']
    %15 = vsyncpa [#allocation6], 0
    %s16 = scalar_lea.sflag [#allocation6], 1
    %17 = vsyncpa %s16, 0
    %18 = vsyncpa [#allocation8], 0
    %s19 = scalar_lea.sflag [#allocation8], 1
    %20 = vsyncpa %s19, 0
    loop: start=0, step=1, limit=4
    $region2: #{tpu_custom_call.1} parent=1 // loop_pre_header
      _
    $region3: #{tpu_custom_call.1} parent=1 // loop_header
      %s22 = sphi 0, %s26
      %p23 = scmp.ge.s32.totalorder %s22, 4
      %s32 = sphi 0, %s34
      %s35 = sphi 0, %s32
      %s36 = sphi 0, %s35
      %s52 = sphi 0, %s36
      %s58 = sphi 0, %s60
      %s61 = sphi 0, %s58
      %s62 = sphi 0, %s61
      %s78 = sphi 0, %s62
      %s84 = sphi 0, %s86
      %s87 = sphi 0, %s84
      %s88 = sphi 0, %s87
      %s104 = sphi 0, %s88
      %s110 = sphi 0, %s112
      %s113 = sphi 0, %s110
      %s114 = sphi 0, %s113
      %s130 = sphi 0, %s114
      %s134 = sphi 0, %s134
      %s136 = sphi 0, %s134
      %s137 = sphi 0, %s136
      %s151 = sphi 0, %s137
      %s155 = sphi 0, %s155
      %s157 = sphi 0, %s155
      %s158 = sphi 0, %s157
      %s172 = sphi 0, %s158
      %s176 = sphi 0, %s176
      %s178 = sphi 0, %s176
      %s179 = sphi 0, %s178
      %s193 = sphi 0, %s179
      %s197 = sphi 0, %s197
      %s199 = sphi 0, %s197
      %s200 = sphi 0, %s199
      %s214 = sphi 0, %s200
      %s220 = sphi 0, %s222
      %s223 = sphi 0, %s220
      %s224 = sphi 0, %s223
      %s240 = sphi 0, %s224
      %s246 = sphi 0, %s248
      %s249 = sphi 0, %s246
      %s250 = sphi 0, %s249
      %s266 = sphi 0, %s250
    $region4: #{tpu_custom_call.1} parent=1 // loop_header_branch
      %25 = sbr.rel (%p23) target = $region8
    $region5: #{tpu_custom_call.1} parent=1 // loop_body
      %s27 = ssub.s32 %s22, 1
      %s28 = ssub.s32 %s22, 2
      %s29 = sadd.s32 %s22, 1
      %s30 = ssub.s32 %s22, %s29
      %p31 = scmp.eq.s32.totalorder %s30, 0
      %s33 = sadd.s32 %s32, 1
      %s34 = scalar_select %p31, %s32, %s33
      %p37 = pneg %p31
      %p38 = scmp.eq.s32.totalorder %s22, 1
      %p39 = por %p37, %p38
      %p40 = scmp.ne.s32.totalorder %s32, %s35
      %p41 = scmp.eq.s32.totalorder %s22, 0
      %p42 = por %p40, %p41
      %p43 = scmp.ne.s32.totalorder %s32, %s35
      %p44 = scmp.eq.s32.totalorder %s27, 1
      %p45 = por %p43, %p44
      %p46 = scmp.ne.s32.totalorder %s35, %s36
      %p47 = scmp.eq.s32.totalorder %s27, 0
      %p48 = por %p46, %p47
      %p49 = scmp.ne.s32.totalorder %s35, %s36
      %p50 = scmp.eq.s32.totalorder %s28, 1
      %p51 = por %p49, %p50
      %p53 = scmp.ne.s32.totalorder %s36, %s52
      %p54 = scmp.eq.s32.totalorder %s28, 0
      %p55 = por %p53, %p54
      %s56 = ssub.s32 %s22, %s29
      %p57 = scmp.eq.s32.totalorder %s56, 0
      %s59 = sadd.s32 %s58, 1
      %s60 = scalar_select %p57, %s58, %s59
      %p63 = pneg %p57
      %p64 = scmp.eq.s32.totalorder %s22, 1
      %p65 = por %p63, %p64
      %p66 = scmp.ne.s32.totalorder %s58, %s61
      %p67 = scmp.eq.s32.totalorder %s22, 0
      %p68 = por %p66, %p67
      %p69 = scmp.ne.s32.totalorder %s58, %s61
      %p70 = scmp.eq.s32.totalorder %s27, 1
      %p71 = por %p69, %p70
      %p72 = scmp.ne.s32.totalorder %s61, %s62
      %p73 = scmp.eq.s32.totalorder %s27, 0
      %p74 = por %p72, %p73
      %p75 = scmp.ne.s32.totalorder %s61, %s62
      %p76 = scmp.eq.s32.totalorder %s28, 1
      %p77 = por %p75, %p76
      %p79 = scmp.ne.s32.totalorder %s62, %s78
      %p80 = scmp.eq.s32.totalorder %s28, 0
      %p81 = por %p79, %p80
      %s82 = ssub.s32 %s22, %s29
      %p83 = scmp.eq.s32.totalorder %s82, 0
      %s85 = sadd.s32 %s84, 1
      %s86 = scalar_select %p83, %s84, %s85
      %p89 = pneg %p83
      %p90 = scmp.eq.s32.totalorder %s22, 1
      %p91 = por %p89, %p90
      %p92 = scmp.ne.s32.totalorder %s84, %s87
      %p93 = scmp.eq.s32.totalorder %s22, 0
      %p94 = por %p92, %p93
      %p95 = scmp.ne.s32.totalorder %s84, %s87
      %p96 = scmp.eq.s32.totalorder %s27, 1
      %p97 = por %p95, %p96
      %p98 = scmp.ne.s32.totalorder %s87, %s88
      %p99 = scmp.eq.s32.totalorder %s27, 0
      %p100 = por %p98, %p99
      %p101 = scmp.ne.s32.totalorder %s87, %s88
      %p102 = scmp.eq.s32.totalorder %s28, 1
      %p103 = por %p101, %p102
      %p105 = scmp.ne.s32.totalorder %s88, %s104
      %p106 = scmp.eq.s32.totalorder %s28, 0
      %p107 = por %p105, %p106
      %s108 = ssub.s32 %s22, %s29
      %p109 = scmp.eq.s32.totalorder %s108, 0
      %s111 = sadd.s32 %s110, 1
      %s112 = scalar_select %p109, %s110, %s111
      %p115 = pneg %p109
      %p116 = scmp.eq.s32.totalorder %s22, 1
      %p117 = por %p115, %p116
      %p118 = scmp.ne.s32.totalorder %s110, %s113
      %p119 = scmp.eq.s32.totalorder %s22, 0
      %p120 = por %p118, %p119
      %p121 = scmp.ne.s32.totalorder %s110, %s113
      %p122 = scmp.eq.s32.totalorder %s27, 1
      %p123 = por %p121, %p122
      %p124 = scmp.ne.s32.totalorder %s113, %s114
      %p125 = scmp.eq.s32.totalorder %s27, 0
      %p126 = por %p124, %p125
      %p127 = scmp.ne.s32.totalorder %s113, %s114
      %p128 = scmp.eq.s32.totalorder %s28, 1
      %p129 = por %p127, %p128
      %p131 = scmp.ne.s32.totalorder %s114, %s130
      %p132 = scmp.eq.s32.totalorder %s28, 0
      %p133 = por %p131, %p132
      %s135 = sadd.s32 %s134, 1
      %p138 = scmp.eq.s32.totalorder %s22, 1
      %p139 = scmp.ne.s32.totalorder %s134, %s136
      %p140 = scmp.eq.s32.totalorder %s22, 0
      %p141 = por %p139, %p140
      %p142 = scmp.ne.s32.totalorder %s134, %s136
      %p143 = scmp.eq.s32.totalorder %s27, 1
      %p144 = por %p142, %p143
      %p145 = scmp.ne.s32.totalorder %s136, %s137
      %p146 = scmp.eq.s32.totalorder %s27, 0
      %p147 = por %p145, %p146
      %p148 = scmp.ne.s32.totalorder %s136, %s137
      %p149 = scmp.eq.s32.totalorder %s28, 1
      %p150 = por %p148, %p149
      %p152 = scmp.ne.s32.totalorder %s137, %s151
      %p153 = scmp.eq.s32.totalorder %s28, 0
      %p154 = por %p152, %p153
      %s156 = sadd.s32 %s155, 1
      %p159 = scmp.eq.s32.totalorder %s22, 1
      %p160 = scmp.ne.s32.totalorder %s155, %s157
      %p161 = scmp.eq.s32.totalorder %s22, 0
      %p162 = por %p160, %p161
      %p163 = scmp.ne.s32.totalorder %s155, %s157
      %p164 = scmp.eq.s32.totalorder %s27, 1
      %p165 = por %p163, %p164
      %p166 = scmp.ne.s32.totalorder %s157, %s158
      %p167 = scmp.eq.s32.totalorder %s27, 0
      %p168 = por %p166, %p167
      %p169 = scmp.ne.s32.totalorder %s157, %s158
      %p170 = scmp.eq.s32.totalorder %s28, 1
      %p171 = por %p169, %p170
      %p173 = scmp.ne.s32.totalorder %s158, %s172
      %p174 = scmp.eq.s32.totalorder %s28, 0
      %p175 = por %p173, %p174
      %s177 = sadd.s32 %s176, 1
      %p180 = scmp.eq.s32.totalorder %s22, 1
      %p181 = scmp.ne.s32.totalorder %s176, %s178
      %p182 = scmp.eq.s32.totalorder %s22, 0
      %p183 = por %p181, %p182
      %p184 = scmp.ne.s32.totalorder %s176, %s178
      %p185 = scmp.eq.s32.totalorder %s27, 1
      %p186 = por %p184, %p185
      %p187 = scmp.ne.s32.totalorder %s178, %s179
      %p188 = scmp.eq.s32.totalorder %s27, 0
      %p189 = por %p187, %p188
      %p190 = scmp.ne.s32.totalorder %s178, %s179
      %p191 = scmp.eq.s32.totalorder %s28, 1
      %p192 = por %p190, %p191
      %p194 = scmp.ne.s32.totalorder %s179, %s193
      %p195 = scmp.eq.s32.totalorder %s28, 0
      %p196 = por %p194, %p195
      %s198 = sadd.s32 %s197, 1
      %p201 = scmp.eq.s32.totalorder %s22, 1
      %p202 = scmp.ne.s32.totalorder %s197, %s199
      %p203 = scmp.eq.s32.totalorder %s22, 0
      %p204 = por %p202, %p203
      %p205 = scmp.ne.s32.totalorder %s197, %s199
      %p206 = scmp.eq.s32.totalorder %s27, 1
      %p207 = por %p205, %p206
      %p208 = scmp.ne.s32.totalorder %s199, %s200
      %p209 = scmp.eq.s32.totalorder %s27, 0
      %p210 = por %p208, %p209
      %p211 = scmp.ne.s32.totalorder %s199, %s200
      %p212 = scmp.eq.s32.totalorder %s28, 1
      %p213 = por %p211, %p212
      %p215 = scmp.ne.s32.totalorder %s200, %s214
      %p216 = scmp.eq.s32.totalorder %s28, 0
      %p217 = por %p215, %p216
      %s218 = ssub.s32 %s22, %s29
      %p219 = scmp.eq.s32.totalorder %s218, 0
      %s221 = sadd.s32 %s220, 1
      %s222 = scalar_select %p219, %s220, %s221
      %p225 = pneg %p219
      %p226 = scmp.eq.s32.totalorder %s22, 1
      %p227 = por %p225, %p226
      %p228 = scmp.ne.s32.totalorder %s220, %s223
      %p229 = scmp.eq.s32.totalorder %s22, 0
      %p230 = por %p228, %p229
      %p231 = scmp.ne.s32.totalorder %s220, %s223
      %p232 = scmp.eq.s32.totalorder %s27, 1
      %p233 = por %p231, %p232
      %p234 = scmp.ne.s32.totalorder %s223, %s224
      %p235 = scmp.eq.s32.totalorder %s27, 0
      %p236 = por %p234, %p235
      %p237 = scmp.ne.s32.totalorder %s223, %s224
      %p238 = scmp.eq.s32.totalorder %s28, 1
      %p239 = por %p237, %p238
      %p241 = scmp.ne.s32.totalorder %s224, %s240
      %p242 = scmp.eq.s32.totalorder %s28, 0
      %p243 = por %p241, %p242
      %s244 = ssub.s32 %s22, %s29
      %p245 = scmp.eq.s32.totalorder %s244, 0
      %s247 = sadd.s32 %s246, 1
      %s248 = scalar_select %p245, %s246, %s247
      %p251 = pneg %p245
      %p252 = scmp.eq.s32.totalorder %s22, 1
      %p253 = por %p251, %p252
      %p254 = scmp.ne.s32.totalorder %s246, %s249
      %p255 = scmp.eq.s32.totalorder %s22, 0
      %p256 = por %p254, %p255
      %p257 = scmp.ne.s32.totalorder %s246, %s249
      %p258 = scmp.eq.s32.totalorder %s27, 1
      %p259 = por %p257, %p258
      %p260 = scmp.ne.s32.totalorder %s249, %s250
      %p261 = scmp.eq.s32.totalorder %s27, 0
      %p262 = por %p260, %p261
      %p263 = scmp.ne.s32.totalorder %s249, %s250
      %p264 = scmp.eq.s32.totalorder %s28, 1
      %p265 = por %p263, %p264
      %p267 = scmp.ne.s32.totalorder %s250, %s266
      %p268 = scmp.eq.s32.totalorder %s28, 0
      %p269 = por %p267, %p268
      %p270 = scmp.le.s32.totalorder 1, %s22
      %p271 = scmp.lt.s32.totalorder %s22, 3
      %p272 = pnand %p270, %p271
      %p273 = pneg %p272
      // Predicated region
      $region9: #{tpu_custom_call.1} parent=5 // pred_check
        _
      $region10: #{tpu_custom_call.1} parent=5 // pred_check_branch
        %275 = sbr.rel (%p272) target = $region12
      $region11: #{tpu_custom_call.1} parent=5 // pred_region
        %s276 = ssub.s32 %s22, 1
        // Predicated region
        $region13: #{tpu_custom_call.1} parent=11 // pred_check
          %p277 = pneg %p147
        $region14: #{tpu_custom_call.1} parent=11 // pred_check_branch
          %279 = sbr.rel (%p277) target = $region16
        $region15: #{tpu_custom_call.1} parent=11 // pred_region
          _
        $region16: #{tpu_custom_call.1} parent=11 // pred_fallthru
          _
        // Predicated region
        $region17: #{tpu_custom_call.1} parent=11 // pred_check
          %p280 = pneg %p168
        $region18: #{tpu_custom_call.1} parent=11 // pred_check_branch
          %282 = sbr.rel (%p280) target = $region20
        $region19: #{tpu_custom_call.1} parent=11 // pred_region
          _
        $region20: #{tpu_custom_call.1} parent=11 // pred_fallthru
          _
        // Predicated region
        $region21: #{tpu_custom_call.1} parent=11 // pred_check
          %p283 = pneg %p189
        $region22: #{tpu_custom_call.1} parent=11 // pred_check_branch
          %285 = sbr.rel (%p283) target = $region24
        $region23: #{tpu_custom_call.1} parent=11 // pred_region
          _
        $region24: #{tpu_custom_call.1} parent=11 // pred_fallthru
          _
        // Predicated region
        $region25: #{tpu_custom_call.1} parent=11 // pred_check
          %p286 = pneg %p210
        $region26: #{tpu_custom_call.1} parent=11 // pred_check_branch
          %288 = sbr.rel (%p286) target = $region28
        $region27: #{tpu_custom_call.1} parent=11 // pred_region
          _
        $region28: #{tpu_custom_call.1} parent=11 // pred_fallthru
          _
      $region12: #{tpu_custom_call.1} parent=5 // pred_fallthru
        _
      %p289 = scmp.lt.s32.totalorder %s22, 2
      // Predicated region
      $region29: #{tpu_custom_call.1} parent=5 // pred_check
        %p290 = pneg %p289
      $region30: #{tpu_custom_call.1} parent=5 // pred_check_branch
        %292 = sbr.rel (%p290) target = $region32
      $region31: #{tpu_custom_call.1} parent=5 // pred_region
        // Predicated region
        $region33: #{tpu_custom_call.1} parent=31 // pred_check
          %p293 = pneg %p42
        $region34: #{tpu_custom_call.1} parent=31 // pred_check_branch
          %295 = sbr.rel (%p293) target = $region36
        $region35: #{tpu_custom_call.1} parent=31 // pred_region
          %p296 = scmp.lt.s32.totalorder %s22, 1
          %s297 = scalar_select %p296, %s22, 1
          %s298 = smul.addr %s297, 8
          %s299 = scalar_lea.vmem %s0, %s298
        $region36: #{tpu_custom_call.1} parent=31 // pred_fallthru
          _
        // Predicated region
        $region37: #{tpu_custom_call.1} parent=31 // pred_check
          %p300 = pneg %p68
        $region38: #{tpu_custom_call.1} parent=31 // pred_check_branch
          %302 = sbr.rel (%p300) target = $region40
        $region39: #{tpu_custom_call.1} parent=31 // pred_region
          %p303 = scmp.lt.s32.totalorder %s22, 1
          %s304 = scalar_select %p303, %s22, 1
          %s305 = smul.addr %s304, 8
          %s306 = scalar_lea.vmem %s1, %s305
        $region40: #{tpu_custom_call.1} parent=31 // pred_fallthru
          _
        // Predicated region
        $region41: #{tpu_custom_call.1} parent=31 // pred_check
          %p307 = pneg %p94
        $region42: #{tpu_custom_call.1} parent=31 // pred_check_branch
          %309 = sbr.rel (%p307) target = $region44
        $region43: #{tpu_custom_call.1} parent=31 // pred_region
          %p310 = scmp.lt.s32.totalorder %s22, 1
          %s311 = scalar_select %p310, %s22, 1
          %s312 = smul.addr %s311, 8
          %s313 = scalar_lea.vmem %s2, %s312
        $region44: #{tpu_custom_call.1} parent=31 // pred_fallthru
          _
        // Predicated region
        $region45: #{tpu_custom_call.1} parent=31 // pred_check
          %p314 = pneg %p120
        $region46: #{tpu_custom_call.1} parent=31 // pred_check_branch
          %316 = sbr.rel (%p314) target = $region48
        $region47: #{tpu_custom_call.1} parent=31 // pred_region
          %p317 = scmp.lt.s32.totalorder %s22, 1
          %s318 = scalar_select %p317, %s22, 1
          %s319 = smul.addr %s318, 8
          %s320 = scalar_lea.vmem %s3, %s319
        $region48: #{tpu_custom_call.1} parent=31 // pred_fallthru
          _
      $region32: #{tpu_custom_call.1} parent=5 // pred_fallthru
        _
      %p321 = scmp.le.s32.totalorder 1, %s22
      %p322 = scmp.lt.s32.totalorder %s22, 3
      %p323 = pnand %p321, %p322
      %p324 = pneg %p323
      // Predicated region
      $region49: #{tpu_custom_call.1} parent=5 // pred_check
        _
      $region50: #{tpu_custom_call.1} parent=5 // pred_check_branch
        %326 = sbr.rel (%p323) target = $region52
      $region51: #{tpu_custom_call.1} parent=5 // pred_region
        %s327 = ssub.s32 %s22, 1
        %p328 = scmp.lt.s32.totalorder %s27, 1
        %s329 = scalar_select %p328, %s27, 1
        %s330 = smul.addr %s329, 8
        %s331 = scalar_lea.vmem %s0, %s330
        %p332 = pneg %p48
        %p333 = pneg %p45
        %p334 = scmp.lt.s32.totalorder %s27, 1
        %s335 = scalar_select %p334, %s27, 1
        %s336 = smul.addr %s335, 8
        %s337 = scalar_lea.vmem %s1, %s336
        %p338 = pneg %p74
        %p339 = pneg %p71
        %p340 = scmp.lt.s32.totalorder %s27, 1
        %s341 = scalar_select %p340, %s27, 1
        %s342 = smul.addr %s341, 8
        %s343 = scalar_lea.vmem %s2, %s342
        %p344 = pneg %p100
        %p345 = pneg %p97
        %p346 = scmp.lt.s32.totalorder %s27, 1
        %s347 = scalar_select %p346, %s27, 1
        %s348 = smul.addr %s347, 8
        %s349 = scalar_lea.vmem %s3, %s348
        %p350 = pneg %p126
        %p351 = pneg %p123
        %p352 = pneg %p147
        %p353 = pneg %p144
        %p354 = pneg %p168
        %p355 = pneg %p165
        %p356 = pneg %p189
        %p357 = pneg %p186
        %p358 = pneg %p210
        %p359 = pneg %p207
        %p360 = pneg %p236
        %p361 = pneg %p233
        %s362 = sand.u32 %s223, 1
        %s363 = scalar_lea.sflag [#allocation6], %s362
        %s364 = sand.u32 %s223, 1
        %s365 = smul.addr %s364, 8
        %s366 = scalar_lea.vmem [#allocation5], %s365
        %p367 = pneg %p262
        %p368 = pneg %p259
        %s369 = sand.u32 %s249, 1
        %s370 = scalar_lea.sflag [#allocation8], %s369
        %s371 = sand.u32 %s249, 1
        %s372 = smul.addr %s371, 32
        %s373 = scalar_lea.vmem [#allocation7], %s372
        %p374 = scmp.lt.s32.totalorder %s27, 1
        %s375 = scalar_select %p374, %s27, 1
        %s376 = smul.addr %s375, 8
        %s377 = scalar_lea.vmem %s0, %s376
        %p378 = scmp.lt.s32.totalorder %s27, 1
        %s379 = scalar_select %p378, %s27, 1
        %s380 = smul.addr %s379, 8
        %s381 = scalar_lea.vmem %s1, %s380
        %p382 = scmp.lt.s32.totalorder %s27, 1
        %s383 = scalar_select %p382, %s27, 1
        %s384 = smul.addr %s383, 8
        %s385 = scalar_lea.vmem %s2, %s384
        %p386 = scmp.lt.s32.totalorder %s27, 1
        %s387 = scalar_select %p386, %s27, 1
        %s388 = smul.addr %s387, 8
        %s389 = scalar_lea.vmem %s3, %s388
        %v390 = vld [vmem:[%s377] sm:$0xff]
        %v391 = vld [vmem:[%s381] sm:$0xff]
        %v392 = vld [vmem:[%s385] sm:$0xff]
        %v393 = vld [vmem:[%s4] sm:$0xff]
        %v394 = vld [vmem:[%s4 + $0x8] sm:$0xff]
        %v395 = vld [vmem:[%s4 + $0x10] sm:$0xff]
        %v396 = vld [vmem:[%s4 + $0x18] sm:$0xff]
        %v397 = vld [vmem:[%s5] sm:$0x1]
        %v399 = vlaneseq
        %v400 = vshrl.u32 %v399, 7
        %v401 = vsub.s32 0, %v400
        %v402 = vrot.slane %v397, %v401
        %vm404 = vcmask 261120
        %v406 = vsel %vm404, %v390, 0
        %408 = vmatprep.subr.mxu0 0.0
        %409 = vmatpush1.msra.mxu0 %v393
        %410 = vmatprep.subr.mxu0 0.0
        %411 = vmatpush1.msra.mxu0 %v394
        %412 = vmatprep.subr.mxu0 0.0
        %413 = vmatpush1.msra.mxu0 %v395
        %414 = vmatprep.subr.mxu0 0.0
        %415 = vmatpush1.msra.mxu0 %v396
        %416 = vmatprep.subr.mxu0 0.0
        %417 = vmatpush1.msra.mxu0 0.0
        %418 = vmatprep.subr.mxu0 0.0
        %419 = vmatpush1.msra.mxu0 0.0
        %420 = vmatprep.subr.mxu0 0.0
        %421 = vmatpush1.msra.mxu0 0.0
        %422 = vmatprep.subr.mxu0 0.0
        %423 = vmatpush1.msra.mxu0 0.0
        %424 = vmatprep.subr.mxu0 0.0
        %425 = vmatpush1.msra.mxu0 0.0
        %426 = vmatprep.subr.mxu0 0.0
        %427 = vmatpush1.msra.mxu0 0.0
        %428 = vmatprep.subr.mxu0 0.0
        %429 = vmatpush1.msra.mxu0 0.0
        %430 = vmatprep.subr.mxu0 0.0
        %431 = vmatpush1.msra.mxu0 0.0
        %432 = vmatprep.subr.mxu0 0.0
        %433 = vmatpush1.msra.mxu0 0.0
        %434 = vmatprep.subr.mxu0 0.0
        %435 = vmatpush1.msra.mxu0 0.0
        %436 = vmatprep.subr.mxu0 0.0
        %437 = vmatpush1.msra.mxu0 0.0
        %438 = vmatprep.subr.mxu0 0.0
        %439 = vmatpush1.msra.mxu0 0.0
        %440 = vmatprep.subr.mxu0 0.0
        %441 = vmatpush1.msra.mxu0 0.0
        %442 = vmatprep.subr.mxu0 0.0
        %443 = vmatpush1.msra.mxu0 0.0
        %444 = vmatprep.subr.mxu0 0.0
        %445 = vmatpush1.msra.mxu0 0.0
        %446 = vmatprep.subr.mxu0 0.0
        %447 = vmatpush1.msra.mxu0 0.0
        %448 = vmatprep.subr.mxu0 0.0
        %449 = vmatpush1.msra.mxu0 0.0
        %450 = vmatprep.subr.mxu0 0.0
        %451 = vmatpush1.msra.mxu0 0.0
        %452 = vmatprep.subr.mxu0 0.0
        %453 = vmatpush1.msra.mxu0 0.0
        %454 = vmatprep.subr.mxu0 0.0
        %455 = vmatpush1.msra.mxu0 0.0
        %456 = vmatprep.subr.mxu0 0.0
        %457 = vmatpush1.msra.mxu0 0.0
        %458 = vmatprep.subr.mxu0 0.0
        %459 = vmatpush1.msra.mxu0 0.0
        %460 = vmatprep.subr.mxu0 0.0
        %461 = vmatpush1.msra.mxu0 0.0
        %462 = vmatprep.subr.mxu0 0.0
        %463 = vmatpush1.msra.mxu0 0.0
        %464 = vmatprep.subr.mxu0 0.0
        %465 = vmatpush1.msra.mxu0 0.0
        %466 = vmatprep.subr.mxu0 0.0
        %467 = vmatpush1.msra.mxu0 0.0
        %468 = vmatprep.subr.mxu0 0.0
        %469 = vmatpush1.msra.mxu0 0.0
        %470 = vmatprep.subr.mxu0 0.0
        %471 = vmatpush1.msra.mxu0 0.0
        %472 = vmatprep.mubr.f32.mxu0 0.0
        %473 = vmatmul.mubr.f32.gmra.mrb[0].mxu0 %v406
        %v474 = vpop.f32.mrb[0].mxu0
        %v475 = vadd.f32 %v402, %v474
        %v476 = vpop.f32.mrb[0].mxu0
        %477 = vdwg.mxu0
        %v478 = vmul.f32 %v475, 0.35355338
        %vm479 = vcmask 64512
        %480 = vst.msk [vmem:[#allocation2] sm:$0xff] %vm479, %v478
        %s481 = scalar_lea.vmem %s4, 128
        %v482 = vld [vmem:[%s481] sm:$0xff]
        %v483 = vld [vmem:[%s481 + $0x8] sm:$0xff]
        %v484 = vld [vmem:[%s481 + $0x10] sm:$0xff]
        %v485 = vld [vmem:[%s481 + $0x18] sm:$0xff]
        %s486 = scalar_lea.vmem %s5, 4
        %v487 = vld [vmem:[%s486] sm:$0x1]
        %v489 = vlaneseq
        %v490 = vshrl.u32 %v489, 7
        %v491 = vsub.s32 0, %v490
        %v492 = vrot.slane %v487, %v491
        %v495 = vsel %vm404, %v391, 0
        %497 = vmatprep.subr.mxu0 0.0
        %498 = vmatpush1.msra.mxu0 %v482
        %499 = vmatprep.subr.mxu0 0.0
        %500 = vmatpush1.msra.mxu0 %v483
        %501 = vmatprep.subr.mxu0 0.0
        %502 = vmatpush1.msra.mxu0 %v484
        %503 = vmatprep.subr.mxu0 0.0
        %504 = vmatpush1.msra.mxu0 %v485
        %505 = vmatprep.subr.mxu0 0.0
        %506 = vmatpush1.msra.mxu0 0.0
        %507 = vmatprep.subr.mxu0 0.0
        %508 = vmatpush1.msra.mxu0 0.0
        %509 = vmatprep.subr.mxu0 0.0
        %510 = vmatpush1.msra.mxu0 0.0
        %511 = vmatprep.subr.mxu0 0.0
        %512 = vmatpush1.msra.mxu0 0.0
        %513 = vmatprep.subr.mxu0 0.0
        %514 = vmatpush1.msra.mxu0 0.0
        %515 = vmatprep.subr.mxu0 0.0
        %516 = vmatpush1.msra.mxu0 0.0
        %517 = vmatprep.subr.mxu0 0.0
        %518 = vmatpush1.msra.mxu0 0.0
        %519 = vmatprep.subr.mxu0 0.0
        %520 = vmatpush1.msra.mxu0 0.0
        %521 = vmatprep.subr.mxu0 0.0
        %522 = vmatpush1.msra.mxu0 0.0
        %523 = vmatprep.subr.mxu0 0.0
        %524 = vmatpush1.msra.mxu0 0.0
        %525 = vmatprep.subr.mxu0 0.0
        %526 = vmatpush1.msra.mxu0 0.0
        %527 = vmatprep.subr.mxu0 0.0
        %528 = vmatpush1.msra.mxu0 0.0
        %529 = vmatprep.subr.mxu0 0.0
        %530 = vmatpush1.msra.mxu0 0.0
        %531 = vmatprep.subr.mxu0 0.0
        %532 = vmatpush1.msra.mxu0 0.0
        %533 = vmatprep.subr.mxu0 0.0
        %534 = vmatpush1.msra.mxu0 0.0
        %535 = vmatprep.subr.mxu0 0.0
        %536 = vmatpush1.msra.mxu0 0.0
        %537 = vmatprep.subr.mxu0 0.0
        %538 = vmatpush1.msra.mxu0 0.0
        %539 = vmatprep.subr.mxu0 0.0
        %540 = vmatpush1.msra.mxu0 0.0
        %541 = vmatprep.subr.mxu0 0.0
        %542 = vmatpush1.msra.mxu0 0.0
        %543 = vmatprep.subr.mxu0 0.0
        %544 = vmatpush1.msra.mxu0 0.0
        %545 = vmatprep.subr.mxu0 0.0
        %546 = vmatpush1.msra.mxu0 0.0
        %547 = vmatprep.subr.mxu0 0.0
        %548 = vmatpush1.msra.mxu0 0.0
        %549 = vmatprep.subr.mxu0 0.0
        %550 = vmatpush1.msra.mxu0 0.0
        %551 = vmatprep.subr.mxu0 0.0
        %552 = vmatpush1.msra.mxu0 0.0
        %553 = vmatprep.subr.mxu0 0.0
        %554 = vmatpush1.msra.mxu0 0.0
        %555 = vmatprep.subr.mxu0 0.0
        %556 = vmatpush1.msra.mxu0 0.0
        %557 = vmatprep.subr.mxu0 0.0
        %558 = vmatpush1.msra.mxu0 0.0
        %559 = vmatprep.subr.mxu0 0.0
        %560 = vmatpush1.msra.mxu0 0.0
        %561 = vmatprep.mubr.f32.mxu0 0.0
        %562 = vmatmul.mubr.f32.gmra.mrb[0].mxu0 %v495
        %v563 = vpop.f32.mrb[0].mxu0
        %v564 = vadd.f32 %v492, %v563
        %v565 = vpop.f32.mrb[0].mxu0
        %566 = vdwg.mxu0
        %567 = vst.msk [vmem:[#allocation3] sm:$0xff] %vm479, %v564
        %s568 = scalar_lea.vmem %s4, 256
        %v569 = vld [vmem:[%s568] sm:$0xff]
        %v570 = vld [vmem:[%s568 + $0x8] sm:$0xff]
        %v571 = vld [vmem:[%s568 + $0x10] sm:$0xff]
        %v572 = vld [vmem:[%s568 + $0x18] sm:$0xff]
        %s573 = scalar_lea.vmem %s5, 8
        %v574 = vld [vmem:[%s573] sm:$0x1]
        %v576 = vlaneseq
        %v577 = vshrl.u32 %v576, 7
        %v578 = vsub.s32 0, %v577
        %v579 = vrot.slane %v574, %v578
        %v582 = vsel %vm404, %v392, 0
        %584 = vmatprep.subr.mxu0 0.0
        %585 = vmatpush1.msra.mxu0 %v569
        %586 = vmatprep.subr.mxu0 0.0
        %587 = vmatpush1.msra.mxu0 %v570
        %588 = vmatprep.subr.mxu0 0.0
        %589 = vmatpush1.msra.mxu0 %v571
        %590 = vmatprep.subr.mxu0 0.0
        %591 = vmatpush1.msra.mxu0 %v572
        %592 = vmatprep.subr.mxu0 0.0
        %593 = vmatpush1.msra.mxu0 0.0
        %594 = vmatprep.subr.mxu0 0.0
        %595 = vmatpush1.msra.mxu0 0.0
        %596 = vmatprep.subr.mxu0 0.0
        %597 = vmatpush1.msra.mxu0 0.0
        %598 = vmatprep.subr.mxu0 0.0
        %599 = vmatpush1.msra.mxu0 0.0
        %600 = vmatprep.subr.mxu0 0.0
        %601 = vmatpush1.msra.mxu0 0.0
        %602 = vmatprep.subr.mxu0 0.0
        %603 = vmatpush1.msra.mxu0 0.0
        %604 = vmatprep.subr.mxu0 0.0
        %605 = vmatpush1.msra.mxu0 0.0
        %606 = vmatprep.subr.mxu0 0.0
        %607 = vmatpush1.msra.mxu0 0.0
        %608 = vmatprep.subr.mxu0 0.0
        %609 = vmatpush1.msra.mxu0 0.0
        %610 = vmatprep.subr.mxu0 0.0
        %611 = vmatpush1.msra.mxu0 0.0
        %612 = vmatprep.subr.mxu0 0.0
        %613 = vmatpush1.msra.mxu0 0.0
        %614 = vmatprep.subr.mxu0 0.0
        %615 = vmatpush1.msra.mxu0 0.0
        %616 = vmatprep.subr.mxu0 0.0
        %617 = vmatpush1.msra.mxu0 0.0
        %618 = vmatprep.subr.mxu0 0.0
        %619 = vmatpush1.msra.mxu0 0.0
        %620 = vmatprep.subr.mxu0 0.0
        %621 = vmatpush1.msra.mxu0 0.0
        %622 = vmatprep.subr.mxu0 0.0
        %623 = vmatpush1.msra.mxu0 0.0
        %624 = vmatprep.subr.mxu0 0.0
        %625 = vmatpush1.msra.mxu0 0.0
        %626 = vmatprep.subr.mxu0 0.0
        %627 = vmatpush1.msra.mxu0 0.0
        %628 = vmatprep.subr.mxu0 0.0
        %629 = vmatpush1.msra.mxu0 0.0
        %630 = vmatprep.subr.mxu0 0.0
        %631 = vmatpush1.msra.mxu0 0.0
        %632 = vmatprep.subr.mxu0 0.0
        %633 = vmatpush1.msra.mxu0 0.0
        %634 = vmatprep.subr.mxu0 0.0
        %635 = vmatpush1.msra.mxu0 0.0
        %636 = vmatprep.subr.mxu0 0.0
        %637 = vmatpush1.msra.mxu0 0.0
        %638 = vmatprep.subr.mxu0 0.0
        %639 = vmatpush1.msra.mxu0 0.0
        %640 = vmatprep.subr.mxu0 0.0
        %641 = vmatpush1.msra.mxu0 0.0
        %642 = vmatprep.subr.mxu0 0.0
        %643 = vmatpush1.msra.mxu0 0.0
        %644 = vmatprep.subr.mxu0 0.0
        %645 = vmatpush1.msra.mxu0 0.0
        %646 = vmatprep.subr.mxu0 0.0
        %647 = vmatpush1.msra.mxu0 0.0
        %648 = vmatprep.mubr.f32.mxu0 0.0
        %649 = vmatmul.mubr.f32.gmra.mrb[0].mxu0 %v582
        %v650 = vpop.f32.mrb[0].mxu0
        %v651 = vadd.f32 %v579, %v650
        %v652 = vpop.f32.mrb[0].mxu0
        %653 = vdwg.mxu0
        %654 = vst.msk [vmem:[#allocation4] sm:$0xff] %vm479, %v651
        %s655 = scalar_lea.vmem %s4, 32
        %v656 = vld [vmem:[%s655] sm:$0xff]
        %v657 = vld [vmem:[%s655 + $0x8] sm:$0xff]
        %v658 = vld [vmem:[%s655 + $0x10] sm:$0xff]
        %v659 = vld [vmem:[%s655 + $0x18] sm:$0xff]
        %s660 = scalar_lea.vmem %s5, 1
        %v661 = vld [vmem:[%s660] sm:$0x1]
        %v663 = vlaneseq
        %v664 = vshrl.u32 %v663, 7
        %v665 = vsub.s32 0, %v664
        %v666 = vrot.slane %v661, %v665
        %668 = vmatprep.subr.mxu0 0.0
        %669 = vmatpush1.msra.mxu0 %v656
        %670 = vmatprep.subr.mxu0 0.0
        %671 = vmatpush1.msra.mxu0 %v657
        %672 = vmatprep.subr.mxu0 0.0
        %673 = vmatpush1.msra.mxu0 %v658
        %674 = vmatprep.subr.mxu0 0.0
        %675 = vmatpush1.msra.mxu0 %v659
        %676 = vmatprep.subr.mxu0 0.0
        %677 = vmatpush1.msra.mxu0 0.0
        %678 = vmatprep.subr.mxu0 0.0
        %679 = vmatpush1.msra.mxu0 0.0
        %680 = vmatprep.subr.mxu0 0.0
        %681 = vmatpush1.msra.mxu0 0.0
        %682 = vmatprep.subr.mxu0 0.0
        %683 = vmatpush1.msra.mxu0 0.0
        %684 = vmatprep.subr.mxu0 0.0
        %685 = vmatpush1.msra.mxu0 0.0
        %686 = vmatprep.subr.mxu0 0.0
        %687 = vmatpush1.msra.mxu0 0.0
        %688 = vmatprep.subr.mxu0 0.0
        %689 = vmatpush1.msra.mxu0 0.0
        %690 = vmatprep.subr.mxu0 0.0
        %691 = vmatpush1.msra.mxu0 0.0
        %692 = vmatprep.subr.mxu0 0.0
        %693 = vmatpush1.msra.mxu0 0.0
        %694 = vmatprep.subr.mxu0 0.0
        %695 = vmatpush1.msra.mxu0 0.0
        %696 = vmatprep.subr.mxu0 0.0
        %697 = vmatpush1.msra.mxu0 0.0
        %698 = vmatprep.subr.mxu0 0.0
        %699 = vmatpush1.msra.mxu0 0.0
        %700 = vmatprep.subr.mxu0 0.0
        %701 = vmatpush1.msra.mxu0 0.0
        %702 = vmatprep.subr.mxu0 0.0
        %703 = vmatpush1.msra.mxu0 0.0
        %704 = vmatprep.subr.mxu0 0.0
        %705 = vmatpush1.msra.mxu0 0.0
        %706 = vmatprep.subr.mxu0 0.0
        %707 = vmatpush1.msra.mxu0 0.0
        %708 = vmatprep.subr.mxu0 0.0
        %709 = vmatpush1.msra.mxu0 0.0
        %710 = vmatprep.subr.mxu0 0.0
        %711 = vmatpush1.msra.mxu0 0.0
        %712 = vmatprep.subr.mxu0 0.0
        %713 = vmatpush1.msra.mxu0 0.0
        %714 = vmatprep.subr.mxu0 0.0
        %715 = vmatpush1.msra.mxu0 0.0
        %716 = vmatprep.subr.mxu0 0.0
        %717 = vmatpush1.msra.mxu0 0.0
        %718 = vmatprep.subr.mxu0 0.0
        %719 = vmatpush1.msra.mxu0 0.0
        %720 = vmatprep.subr.mxu0 0.0
        %721 = vmatpush1.msra.mxu0 0.0
        %722 = vmatprep.subr.mxu0 0.0
        %723 = vmatpush1.msra.mxu0 0.0
        %724 = vmatprep.subr.mxu0 0.0
        %725 = vmatpush1.msra.mxu0 0.0
        %726 = vmatprep.subr.mxu0 0.0
        %727 = vmatpush1.msra.mxu0 0.0
        %728 = vmatprep.subr.mxu0 0.0
        %729 = vmatpush1.msra.mxu0 0.0
        %730 = vmatprep.subr.mxu0 0.0
        %731 = vmatpush1.msra.mxu0 0.0
        %732 = vmatprep.mubr.f32.mxu0 0.0
        %733 = vmatmul.mubr.f32.gmra.mrb[0].mxu0 %v406
        %v734 = vpop.f32.mrb[0].mxu0
        %v735 = vadd.f32 %v666, %v734
        %v736 = vpop.f32.mrb[0].mxu0
        %737 = vdwg.mxu0
        %v738 = vmul.f32 %v735, 0.35355338
        %s739 = scalar_lea.vmem [#allocation2], 8
        %740 = vst.msk [vmem:[%s739] sm:$0xff] %vm479, %v738
        %s741 = scalar_lea.vmem %s4, 160
        %v742 = vld [vmem:[%s741] sm:$0xff]
        %v743 = vld [vmem:[%s741 + $0x8] sm:$0xff]
        %v744 = vld [vmem:[%s741 + $0x10] sm:$0xff]
        %v745 = vld [vmem:[%s741 + $0x18] sm:$0xff]
        %s746 = scalar_lea.vmem %s5, 5
        %v747 = vld [vmem:[%s746] sm:$0x1]
        %v749 = vlaneseq
        %v750 = vshrl.u32 %v749, 7
        %v751 = vsub.s32 0, %v750
        %v752 = vrot.slane %v747, %v751
        %754 = vmatprep.subr.mxu0 0.0
        %755 = vmatpush1.msra.mxu0 %v742
        %756 = vmatprep.subr.mxu0 0.0
        %757 = vmatpush1.msra.mxu0 %v743
        %758 = vmatprep.subr.mxu0 0.0
        %759 = vmatpush1.msra.mxu0 %v744
        %760 = vmatprep.subr.mxu0 0.0
        %761 = vmatpush1.msra.mxu0 %v745
        %762 = vmatprep.subr.mxu0 0.0
        %763 = vmatpush1.msra.mxu0 0.0
        %764 = vmatprep.subr.mxu0 0.0
        %765 = vmatpush1.msra.mxu0 0.0
        %766 = vmatprep.subr.mxu0 0.0
        %767 = vmatpush1.msra.mxu0 0.0
        %768 = vmatprep.subr.mxu0 0.0
        %769 = vmatpush1.msra.mxu0 0.0
        %770 = vmatprep.subr.mxu0 0.0
        %771 = vmatpush1.msra.mxu0 0.0
        %772 = vmatprep.subr.mxu0 0.0
        %773 = vmatpush1.msra.mxu0 0.0
        %774 = vmatprep.subr.mxu0 0.0
        %775 = vmatpush1.msra.mxu0 0.0
        %776 = vmatprep.subr.mxu0 0.0
        %777 = vmatpush1.msra.mxu0 0.0
        %778 = vmatprep.subr.mxu0 0.0
        %779 = vmatpush1.msra.mxu0 0.0
        %780 = vmatprep.subr.mxu0 0.0
        %781 = vmatpush1.msra.mxu0 0.0
        %782 = vmatprep.subr.mxu0 0.0
        %783 = vmatpush1.msra.mxu0 0.0
        %784 = vmatprep.subr.mxu0 0.0
        %785 = vmatpush1.msra.mxu0 0.0
        %786 = vmatprep.subr.mxu0 0.0
        %787 = vmatpush1.msra.mxu0 0.0
        %788 = vmatprep.subr.mxu0 0.0
        %789 = vmatpush1.msra.mxu0 0.0
        %790 = vmatprep.subr.mxu0 0.0
        %791 = vmatpush1.msra.mxu0 0.0
        %792 = vmatprep.subr.mxu0 0.0
        %793 = vmatpush1.msra.mxu0 0.0
        %794 = vmatprep.subr.mxu0 0.0
        %795 = vmatpush1.msra.mxu0 0.0
        %796 = vmatprep.subr.mxu0 0.0
        %797 = vmatpush1.msra.mxu0 0.0
        %798 = vmatprep.subr.mxu0 0.0
        %799 = vmatpush1.msra.mxu0 0.0
        %800 = vmatprep.subr.mxu0 0.0
        %801 = vmatpush1.msra.mxu0 0.0
        %802 = vmatprep.subr.mxu0 0.0
        %803 = vmatpush1.msra.mxu0 0.0
        %804 = vmatprep.subr.mxu0 0.0
        %805 = vmatpush1.msra.mxu0 0.0
        %806 = vmatprep.subr.mxu0 0.0
        %807 = vmatpush1.msra.mxu0 0.0
        %808 = vmatprep.subr.mxu0 0.0
        %809 = vmatpush1.msra.mxu0 0.0
        %810 = vmatprep.subr.mxu0 0.0
        %811 = vmatpush1.msra.mxu0 0.0
        %812 = vmatprep.subr.mxu0 0.0
        %813 = vmatpush1.msra.mxu0 0.0
        %814 = vmatprep.subr.mxu0 0.0
        %815 = vmatpush1.msra.mxu0 0.0
        %816 = vmatprep.subr.mxu0 0.0
        %817 = vmatpush1.msra.mxu0 0.0
        %818 = vmatprep.mubr.f32.mxu0 0.0
        %819 = vmatmul.mubr.f32.gmra.mrb[0].mxu0 %v495
        %v820 = vpop.f32.mrb[0].mxu0
        %v821 = vadd.f32 %v752, %v820
        %v822 = vpop.f32.mrb[0].mxu0
        %823 = vdwg.mxu0
        %s824 = scalar_lea.vmem [#allocation3], 8
        %825 = vst.msk [vmem:[%s824] sm:$0xff] %vm479, %v821
        %s826 = scalar_lea.vmem %s4, 288
        %v827 = vld [vmem:[%s826] sm:$0xff]
        %v828 = vld [vmem:[%s826 + $0x8] sm:$0xff]
        %v829 = vld [vmem:[%s826 + $0x10] sm:$0xff]
        %v830 = vld [vmem:[%s826 + $0x18] sm:$0xff]
        %s831 = scalar_lea.vmem %s5, 9
        %v832 = vld [vmem:[%s831] sm:$0x1]
        %v834 = vlaneseq
        %v835 = vshrl.u32 %v834, 7
        %v836 = vsub.s32 0, %v835
        %v837 = vrot.slane %v832, %v836
        %839 = vmatprep.subr.mxu0 0.0
        %840 = vmatpush1.msra.mxu0 %v827
        %841 = vmatprep.subr.mxu0 0.0
        %842 = vmatpush1.msra.mxu0 %v828
        %843 = vmatprep.subr.mxu0 0.0
        %844 = vmatpush1.msra.mxu0 %v829
        %845 = vmatprep.subr.mxu0 0.0
        %846 = vmatpush1.msra.mxu0 %v830
        %847 = vmatprep.subr.mxu0 0.0
        %848 = vmatpush1.msra.mxu0 0.0
        %849 = vmatprep.subr.mxu0 0.0
        %850 = vmatpush1.msra.mxu0 0.0
        %851 = vmatprep.subr.mxu0 0.0
        %852 = vmatpush1.msra.mxu0 0.0
        %853 = vmatprep.subr.mxu0 0.0
        %854 = vmatpush1.msra.mxu0 0.0
        %855 = vmatprep.subr.mxu0 0.0
        %856 = vmatpush1.msra.mxu0 0.0
        %857 = vmatprep.subr.mxu0 0.0
        %858 = vmatpush1.msra.mxu0 0.0
        %859 = vmatprep.subr.mxu0 0.0
        %860 = vmatpush1.msra.mxu0 0.0
        %861 = vmatprep.subr.mxu0 0.0
        %862 = vmatpush1.msra.mxu0 0.0
        %863 = vmatprep.subr.mxu0 0.0
        %864 = vmatpush1.msra.mxu0 0.0
        %865 = vmatprep.subr.mxu0 0.0
        %866 = vmatpush1.msra.mxu0 0.0
        %867 = vmatprep.subr.mxu0 0.0
        %868 = vmatpush1.msra.mxu0 0.0
        %869 = vmatprep.subr.mxu0 0.0
        %870 = vmatpush1.msra.mxu0 0.0
        %871 = vmatprep.subr.mxu0 0.0
        %872 = vmatpush1.msra.mxu0 0.0
        %873 = vmatprep.subr.mxu0 0.0
        %874 = vmatpush1.msra.mxu0 0.0
        %875 = vmatprep.subr.mxu0 0.0
        %876 = vmatpush1.msra.mxu0 0.0
        %877 = vmatprep.subr.mxu0 0.0
        %878 = vmatpush1.msra.mxu0 0.0
        %879 = vmatprep.subr.mxu0 0.0
        %880 = vmatpush1.msra.mxu0 0.0
        %881 = vmatprep.subr.mxu0 0.0
        %882 = vmatpush1.msra.mxu0 0.0
        %883 = vmatprep.subr.mxu0 0.0
        %884 = vmatpush1.msra.mxu0 0.0
        %885 = vmatprep.subr.mxu0 0.0
        %886 = vmatpush1.msra.mxu0 0.0
        %887 = vmatprep.subr.mxu0 0.0
        %888 = vmatpush1.msra.mxu0 0.0
        %889 = vmatprep.subr.mxu0 0.0
        %890 = vmatpush1.msra.mxu0 0.0
        %891 = vmatprep.subr.mxu0 0.0
        %892 = vmatpush1.msra.mxu0 0.0
        %893 = vmatprep.subr.mxu0 0.0
        %894 = vmatpush1.msra.mxu0 0.0
        %895 = vmatprep.subr.mxu0 0.0
        %896 = vmatpush1.msra.mxu0 0.0
        %897 = vmatprep.subr.mxu0 0.0
        %898 = vmatpush1.msra.mxu0 0.0
        %899 = vmatprep.subr.mxu0 0.0
        %900 = vmatpush1.msra.mxu0 0.0
        %901 = vmatprep.subr.mxu0 0.0
        %902 = vmatpush1.msra.mxu0 0.0
        %903 = vmatprep.mubr.f32.mxu0 0.0
        %904 = vmatmul.mubr.f32.gmra.mrb[0].mxu0 %v582
        %v905 = vpop.f32.mrb[0].mxu0
        %v906 = vadd.f32 %v837, %v905
        %v907 = vpop.f32.mrb[0].mxu0
        %908 = vdwg.mxu0
        %s909 = scalar_lea.vmem [#allocation4], 8
        %910 = vst.msk [vmem:[%s909] sm:$0xff] %vm479, %v906
        %s911 = scalar_lea.vmem %s4, 64
        %v912 = vld [vmem:[%s911] sm:$0xff]
        %v913 = vld [vmem:[%s911 + $0x8] sm:$0xff]
        %v914 = vld [vmem:[%s911 + $0x10] sm:$0xff]
        %v915 = vld [vmem:[%s911 + $0x18] sm:$0xff]
        %s916 = scalar_lea.vmem %s5, 2
        %v917 = vld [vmem:[%s916] sm:$0x1]
        %v919 = vlaneseq
        %v920 = vshrl.u32 %v919, 7
        %v921 = vsub.s32 0, %v920
        %v922 = vrot.slane %v917, %v921
        %924 = vmatprep.subr.mxu0 0.0
        %925 = vmatpush1.msra.mxu0 %v912
        %926 = vmatprep.subr.mxu0 0.0
        %927 = vmatpush1.msra.mxu0 %v913
        %928 = vmatprep.subr.mxu0 0.0
        %929 = vmatpush1.msra.mxu0 %v914
        %930 = vmatprep.subr.mxu0 0.0
        %931 = vmatpush1.msra.mxu0 %v915
        %932 = vmatprep.subr.mxu0 0.0
        %933 = vmatpush1.msra.mxu0 0.0
        %934 = vmatprep.subr.mxu0 0.0
        %935 = vmatpush1.msra.mxu0 0.0
        %936 = vmatprep.subr.mxu0 0.0
        %937 = vmatpush1.msra.mxu0 0.0
        %938 = vmatprep.subr.mxu0 0.0
        %939 = vmatpush1.msra.mxu0 0.0
        %940 = vmatprep.subr.mxu0 0.0
        %941 = vmatpush1.msra.mxu0 0.0
        %942 = vmatprep.subr.mxu0 0.0
        %943 = vmatpush1.msra.mxu0 0.0
        %944 = vmatprep.subr.mxu0 0.0
        %945 = vmatpush1.msra.mxu0 0.0
        %946 = vmatprep.subr.mxu0 0.0
        %947 = vmatpush1.msra.mxu0 0.0
        %948 = vmatprep.subr.mxu0 0.0
        %949 = vmatpush1.msra.mxu0 0.0
        %950 = vmatprep.subr.mxu0 0.0
        %951 = vmatpush1.msra.mxu0 0.0
        %952 = vmatprep.subr.mxu0 0.0
        %953 = vmatpush1.msra.mxu0 0.0
        %954 = vmatprep.subr.mxu0 0.0
        %955 = vmatpush1.msra.mxu0 0.0
        %956 = vmatprep.subr.mxu0 0.0
        %957 = vmatpush1.msra.mxu0 0.0
        %958 = vmatprep.subr.mxu0 0.0
        %959 = vmatpush1.msra.mxu0 0.0
        %960 = vmatprep.subr.mxu0 0.0
        %961 = vmatpush1.msra.mxu0 0.0
        %962 = vmatprep.subr.mxu0 0.0
        %963 = vmatpush1.msra.mxu0 0.0
        %964 = vmatprep.subr.mxu0 0.0
        %965 = vmatpush1.msra.mxu0 0.0
        %966 = vmatprep.subr.mxu0 0.0
        %967 = vmatpush1.msra.mxu0 0.0
        %968 = vmatprep.subr.mxu0 0.0
        %969 = vmatpush1.msra.mxu0 0.0
        %970 = vmatprep.subr.mxu0 0.0
        %971 = vmatpush1.msra.mxu0 0.0
        %972 = vmatprep.subr.mxu0 0.0
        %973 = vmatpush1.msra.mxu0 0.0
        %974 = vmatprep.subr.mxu0 0.0
        %975 = vmatpush1.msra.mxu0 0.0
        %976 = vmatprep.subr.mxu0 0.0
        %977 = vmatpush1.msra.mxu0 0.0
        %978 = vmatprep.subr.mxu0 0.0
        %979 = vmatpush1.msra.mxu0 0.0
        %980 = vmatprep.subr.mxu0 0.0
        %981 = vmatpush1.msra.mxu0 0.0
        %982 = vmatprep.subr.mxu0 0.0
        %983 = vmatpush1.msra.mxu0 0.0
        %984 = vmatprep.subr.mxu0 0.0
        %985 = vmatpush1.msra.mxu0 0.0
        %986 = vmatprep.subr.mxu0 0.0
        %987 = vmatpush1.msra.mxu0 0.0
        %988 = vmatprep.mubr.f32.mxu0 0.0
        %989 = vmatmul.mubr.f32.gmra.mrb[0].mxu0 %v406
        %v990 = vpop.f32.mrb[0].mxu0
        %v991 = vadd.f32 %v922, %v990
        %v992 = vpop.f32.mrb[0].mxu0
        %993 = vdwg.mxu0
        %v994 = vmul.f32 %v991, 0.35355338
        %s995 = scalar_lea.vmem [#allocation2], 16
        %996 = vst.msk [vmem:[%s995] sm:$0xff] %vm479, %v994
        %s997 = scalar_lea.vmem %s4, 192
        %v998 = vld [vmem:[%s997] sm:$0xff]
        %v999 = vld [vmem:[%s997 + $0x8] sm:$0xff]
        %v1000 = vld [vmem:[%s997 + $0x10] sm:$0xff]
        %v1001 = vld [vmem:[%s997 + $0x18] sm:$0xff]
        %s1002 = scalar_lea.vmem %s5, 6
        %v1003 = vld [vmem:[%s1002] sm:$0x1]
        %v1005 = vlaneseq
        %v1006 = vshrl.u32 %v1005, 7
        %v1007 = vsub.s32 0, %v1006
        %v1008 = vrot.slane %v1003, %v1007
        %1010 = vmatprep.subr.mxu0 0.0
        %1011 = vmatpush1.msra.mxu0 %v998
        %1012 = vmatprep.subr.mxu0 0.0
        %1013 = vmatpush1.msra.mxu0 %v999
        %1014 = vmatprep.subr.mxu0 0.0
        %1015 = vmatpush1.msra.mxu0 %v1000
        %1016 = vmatprep.subr.mxu0 0.0
        %1017 = vmatpush1.msra.mxu0 %v1001
        %1018 = vmatprep.subr.mxu0 0.0
        %1019 = vmatpush1.msra.mxu0 0.0
        %1020 = vmatprep.subr.mxu0 0.0
        %1021 = vmatpush1.msra.mxu0 0.0
        %1022 = vmatprep.subr.mxu0 0.0
        %1023 = vmatpush1.msra.mxu0 0.0
        %1024 = vmatprep.subr.mxu0 0.0
        %1025 = vmatpush1.msra.mxu0 0.0
        %1026 = vmatprep.subr.mxu0 0.0
        %1027 = vmatpush1.msra.mxu0 0.0
        %1028 = vmatprep.subr.mxu0 0.0
        %1029 = vmatpush1.msra.mxu0 0.0
        %1030 = vmatprep.subr.mxu0 0.0
        %1031 = vmatpush1.msra.mxu0 0.0
        %1032 = vmatprep.subr.mxu0 0.0
        %1033 = vmatpush1.msra.mxu0 0.0
        %1034 = vmatprep.subr.mxu0 0.0
        %1035 = vmatpush1.msra.mxu0 0.0
        %1036 = vmatprep.subr.mxu0 0.0
        %1037 = vmatpush1.msra.mxu0 0.0
        %1038 = vmatprep.subr.mxu0 0.0
        %1039 = vmatpush1.msra.mxu0 0.0
        %1040 = vmatprep.subr.mxu0 0.0
        %1041 = vmatpush1.msra.mxu0 0.0
        %1042 = vmatprep.subr.mxu0 0.0
        %1043 = vmatpush1.msra.mxu0 0.0
        %1044 = vmatprep.subr.mxu0 0.0
        %1045 = vmatpush1.msra.mxu0 0.0
        %1046 = vmatprep.subr.mxu0 0.0
        %1047 = vmatpush1.msra.mxu0 0.0
        %1048 = vmatprep.subr.mxu0 0.0
        %1049 = vmatpush1.msra.mxu0 0.0
        %1050 = vmatprep.subr.mxu0 0.0
        %1051 = vmatpush1.msra.mxu0 0.0
        %1052 = vmatprep.subr.mxu0 0.0
        %1053 = vmatpush1.msra.mxu0 0.0
        %1054 = vmatprep.subr.mxu0 0.0
        %1055 = vmatpush1.msra.mxu0 0.0
        %1056 = vmatprep.subr.mxu0 0.0
        %1057 = vmatpush1.msra.mxu0 0.0
        %1058 = vmatprep.subr.mxu0 0.0
        %1059 = vmatpush1.msra.mxu0 0.0
        %1060 = vmatprep.subr.mxu0 0.0
        %1061 = vmatpush1.msra.mxu0 0.0
        %1062 = vmatprep.subr.mxu0 0.0
        %1063 = vmatpush1.msra.mxu0 0.0
        %1064 = vmatprep.subr.mxu0 0.0
        %1065 = vmatpush1.msra.mxu0 0.0
        %1066 = vmatprep.subr.mxu0 0.0
        %1067 = vmatpush1.msra.mxu0 0.0
        %1068 = vmatprep.subr.mxu0 0.0
        %1069 = vmatpush1.msra.mxu0 0.0
        %1070 = vmatprep.subr.mxu0 0.0
        %1071 = vmatpush1.msra.mxu0 0.0
        %1072 = vmatprep.subr.mxu0 0.0
        %1073 = vmatpush1.msra.mxu0 0.0
        %1074 = vmatprep.mubr.f32.mxu0 0.0
        %1075 = vmatmul.mubr.f32.gmra.mrb[0].mxu0 %v495
        %v1076 = vpop.f32.mrb[0].mxu0
        %v1077 = vadd.f32 %v1008, %v1076
        %v1078 = vpop.f32.mrb[0].mxu0
        %1079 = vdwg.mxu0
        %s1080 = scalar_lea.vmem [#allocation3], 16
        %1081 = vst.msk [vmem:[%s1080] sm:$0xff] %vm479, %v1077
        %s1082 = scalar_lea.vmem %s4, 320
        %v1083 = vld [vmem:[%s1082] sm:$0xff]
        %v1084 = vld [vmem:[%s1082 + $0x8] sm:$0xff]
        %v1085 = vld [vmem:[%s1082 + $0x10] sm:$0xff]
        %v1086 = vld [vmem:[%s1082 + $0x18] sm:$0xff]
        %s1087 = scalar_lea.vmem %s5, 10
        %v1088 = vld [vmem:[%s1087] sm:$0x1]
        %v1090 = vlaneseq
        %v1091 = vshrl.u32 %v1090, 7
        %v1092 = vsub.s32 0, %v1091
        %v1093 = vrot.slane %v1088, %v1092
        %1095 = vmatprep.subr.mxu0 0.0
        %1096 = vmatpush1.msra.mxu0 %v1083
        %1097 = vmatprep.subr.mxu0 0.0
        %1098 = vmatpush1.msra.mxu0 %v1084
        %1099 = vmatprep.subr.mxu0 0.0
        %1100 = vmatpush1.msra.mxu0 %v1085
        %1101 = vmatprep.subr.mxu0 0.0
        %1102 = vmatpush1.msra.mxu0 %v1086
        %1103 = vmatprep.subr.mxu0 0.0
        %1104 = vmatpush1.msra.mxu0 0.0
        %1105 = vmatprep.subr.mxu0 0.0
        %1106 = vmatpush1.msra.mxu0 0.0
        %1107 = vmatprep.subr.mxu0 0.0
        %1108 = vmatpush1.msra.mxu0 0.0
        %1109 = vmatprep.subr.mxu0 0.0
        %1110 = vmatpush1.msra.mxu0 0.0
        %1111 = vmatprep.subr.mxu0 0.0
        %1112 = vmatpush1.msra.mxu0 0.0
        %1113 = vmatprep.subr.mxu0 0.0
        %1114 = vmatpush1.msra.mxu0 0.0
        %1115 = vmatprep.subr.mxu0 0.0
        %1116 = vmatpush1.msra.mxu0 0.0
        %1117 = vmatprep.subr.mxu0 0.0
        %1118 = vmatpush1.msra.mxu0 0.0
        %1119 = vmatprep.subr.mxu0 0.0
        %1120 = vmatpush1.msra.mxu0 0.0
        %1121 = vmatprep.subr.mxu0 0.0
        %1122 = vmatpush1.msra.mxu0 0.0
        %1123 = vmatprep.subr.mxu0 0.0
        %1124 = vmatpush1.msra.mxu0 0.0
        %1125 = vmatprep.subr.mxu0 0.0
        %1126 = vmatpush1.msra.mxu0 0.0
        %1127 = vmatprep.subr.mxu0 0.0
        %1128 = vmatpush1.msra.mxu0 0.0
        %1129 = vmatprep.subr.mxu0 0.0
        %1130 = vmatpush1.msra.mxu0 0.0
        %1131 = vmatprep.subr.mxu0 0.0
        %1132 = vmatpush1.msra.mxu0 0.0
        %1133 = vmatprep.subr.mxu0 0.0
        %1134 = vmatpush1.msra.mxu0 0.0
        %1135 = vmatprep.subr.mxu0 0.0
        %1136 = vmatpush1.msra.mxu0 0.0
        %1137 = vmatprep.subr.mxu0 0.0
        %1138 = vmatpush1.msra.mxu0 0.0
        %1139 = vmatprep.subr.mxu0 0.0
        %1140 = vmatpush1.msra.mxu0 0.0
        %1141 = vmatprep.subr.mxu0 0.0
        %1142 = vmatpush1.msra.mxu0 0.0
        %1143 = vmatprep.subr.mxu0 0.0
        %1144 = vmatpush1.msra.mxu0 0.0
        %1145 = vmatprep.subr.mxu0 0.0
        %1146 = vmatpush1.msra.mxu0 0.0
        %1147 = vmatprep.subr.mxu0 0.0
        %1148 = vmatpush1.msra.mxu0 0.0
        %1149 = vmatprep.subr.mxu0 0.0
        %1150 = vmatpush1.msra.mxu0 0.0
        %1151 = vmatprep.subr.mxu0 0.0
        %1152 = vmatpush1.msra.mxu0 0.0
        %1153 = vmatprep.subr.mxu0 0.0
        %1154 = vmatpush1.msra.mxu0 0.0
        %1155 = vmatprep.subr.mxu0 0.0
        %1156 = vmatpush1.msra.mxu0 0.0
        %1157 = vmatprep.subr.mxu0 0.0
        %1158 = vmatpush1.msra.mxu0 0.0
        %1159 = vmatprep.mubr.f32.mxu0 0.0
        %1160 = vmatmul.mubr.f32.gmra.mrb[0].mxu0 %v582
        %v1161 = vpop.f32.mrb[0].mxu0
        %v1162 = vadd.f32 %v1093, %v1161
        %v1163 = vpop.f32.mrb[0].mxu0
        %1164 = vdwg.mxu0
        %s1165 = scalar_lea.vmem [#allocation4], 16
        %1166 = vst.msk [vmem:[%s1165] sm:$0xff] %vm479, %v1162
        %s1167 = scalar_lea.vmem %s4, 96
        %v1168 = vld [vmem:[%s1167] sm:$0xff]
        %v1169 = vld [vmem:[%s1167 + $0x8] sm:$0xff]
        %v1170 = vld [vmem:[%s1167 + $0x10] sm:$0xff]
        %v1171 = vld [vmem:[%s1167 + $0x18] sm:$0xff]
        %s1172 = scalar_lea.vmem %s5, 3
        %v1173 = vld [vmem:[%s1172] sm:$0x1]
        %v1175 = vlaneseq
        %v1176 = vshrl.u32 %v1175, 7
        %v1177 = vsub.s32 0, %v1176
        %v1178 = vrot.slane %v1173, %v1177
        %1180 = vmatprep.subr.mxu0 0.0
        %1181 = vmatpush1.msra.mxu0 %v1168
        %1182 = vmatprep.subr.mxu0 0.0
        %1183 = vmatpush1.msra.mxu0 %v1169
        %1184 = vmatprep.subr.mxu0 0.0
        %1185 = vmatpush1.msra.mxu0 %v1170
        %1186 = vmatprep.subr.mxu0 0.0
        %1187 = vmatpush1.msra.mxu0 %v1171
        %1188 = vmatprep.subr.mxu0 0.0
        %1189 = vmatpush1.msra.mxu0 0.0
        %1190 = vmatprep.subr.mxu0 0.0
        %1191 = vmatpush1.msra.mxu0 0.0
        %1192 = vmatprep.subr.mxu0 0.0
        %1193 = vmatpush1.msra.mxu0 0.0
        %1194 = vmatprep.subr.mxu0 0.0
        %1195 = vmatpush1.msra.mxu0 0.0
        %1196 = vmatprep.subr.mxu0 0.0
        %1197 = vmatpush1.msra.mxu0 0.0
        %1198 = vmatprep.subr.mxu0 0.0
        %1199 = vmatpush1.msra.mxu0 0.0
        %1200 = vmatprep.subr.mxu0 0.0
        %1201 = vmatpush1.msra.mxu0 0.0
        %1202 = vmatprep.subr.mxu0 0.0
        %1203 = vmatpush1.msra.mxu0 0.0
        %1204 = vmatprep.subr.mxu0 0.0
        %1205 = vmatpush1.msra.mxu0 0.0
        %1206 = vmatprep.subr.mxu0 0.0
        %1207 = vmatpush1.msra.mxu0 0.0
        %1208 = vmatprep.subr.mxu0 0.0
        %1209 = vmatpush1.msra.mxu0 0.0
        %1210 = vmatprep.subr.mxu0 0.0
        %1211 = vmatpush1.msra.mxu0 0.0
        %1212 = vmatprep.subr.mxu0 0.0
        %1213 = vmatpush1.msra.mxu0 0.0
        %1214 = vmatprep.subr.mxu0 0.0
        %1215 = vmatpush1.msra.mxu0 0.0
        %1216 = vmatprep.subr.mxu0 0.0
        %1217 = vmatpush1.msra.mxu0 0.0
        %1218 = vmatprep.subr.mxu0 0.0
        %1219 = vmatpush1.msra.mxu0 0.0
        %1220 = vmatprep.subr.mxu0 0.0
        %1221 = vmatpush1.msra.mxu0 0.0
        %1222 = vmatprep.subr.mxu0 0.0
        %1223 = vmatpush1.msra.mxu0 0.0
        %1224 = vmatprep.subr.mxu0 0.0
        %1225 = vmatpush1.msra.mxu0 0.0
        %1226 = vmatprep.subr.mxu0 0.0
        %1227 = vmatpush1.msra.mxu0 0.0
        %1228 = vmatprep.subr.mxu0 0.0
        %1229 = vmatpush1.msra.mxu0 0.0
        %1230 = vmatprep.subr.mxu0 0.0
        %1231 = vmatpush1.msra.mxu0 0.0
        %1232 = vmatprep.subr.mxu0 0.0
        %1233 = vmatpush1.msra.mxu0 0.0
        %1234 = vmatprep.subr.mxu0 0.0
        %1235 = vmatpush1.msra.mxu0 0.0
        %1236 = vmatprep.subr.mxu0 0.0
        %1237 = vmatpush1.msra.mxu0 0.0
        %1238 = vmatprep.subr.mxu0 0.0
        %1239 = vmatpush1.msra.mxu0 0.0
        %1240 = vmatprep.subr.mxu0 0.0
        %1241 = vmatpush1.msra.mxu0 0.0
        %1242 = vmatprep.subr.mxu0 0.0
        %1243 = vmatpush1.msra.mxu0 0.0
        %1244 = vmatprep.mubr.f32.mxu0 0.0
        %1245 = vmatmul.mubr.f32.gmra.mrb[0].mxu0 %v406
        %v1246 = vpop.f32.mrb[0].mxu0
        %v1247 = vadd.f32 %v1178, %v1246
        %v1248 = vpop.f32.mrb[0].mxu0
        %1249 = vdwg.mxu0
        %v1250 = vmul.f32 %v1247, 0.35355338
        %s1251 = scalar_lea.vmem [#allocation2], 24
        %1252 = vst.msk [vmem:[%s1251] sm:$0xff] %vm479, %v1250
        %s1253 = scalar_lea.vmem %s4, 224
        %v1254 = vld [vmem:[%s1253] sm:$0xff]
        %v1255 = vld [vmem:[%s1253 + $0x8] sm:$0xff]
        %v1256 = vld [vmem:[%s1253 + $0x10] sm:$0xff]
        %v1257 = vld [vmem:[%s1253 + $0x18] sm:$0xff]
        %s1258 = scalar_lea.vmem %s5, 7
        %v1259 = vld [vmem:[%s1258] sm:$0x1]
        %v1261 = vlaneseq
        %v1262 = vshrl.u32 %v1261, 7
        %v1263 = vsub.s32 0, %v1262
        %v1264 = vrot.slane %v1259, %v1263
        %1266 = vmatprep.subr.mxu0 0.0
        %1267 = vmatpush1.msra.mxu0 %v1254
        %1268 = vmatprep.subr.mxu0 0.0
        %1269 = vmatpush1.msra.mxu0 %v1255
        %1270 = vmatprep.subr.mxu0 0.0
        %1271 = vmatpush1.msra.mxu0 %v1256
        %1272 = vmatprep.subr.mxu0 0.0
        %1273 = vmatpush1.msra.mxu0 %v1257
        %1274 = vmatprep.subr.mxu0 0.0
        %1275 = vmatpush1.msra.mxu0 0.0
        %1276 = vmatprep.subr.mxu0 0.0
        %1277 = vmatpush1.msra.mxu0 0.0
        %1278 = vmatprep.subr.mxu0 0.0
        %1279 = vmatpush1.msra.mxu0 0.0
        %1280 = vmatprep.subr.mxu0 0.0
        %1281 = vmatpush1.msra.mxu0 0.0
        %1282 = vmatprep.subr.mxu0 0.0
        %1283 = vmatpush1.msra.mxu0 0.0
        %1284 = vmatprep.subr.mxu0 0.0
        %1285 = vmatpush1.msra.mxu0 0.0
        %1286 = vmatprep.subr.mxu0 0.0
        %1287 = vmatpush1.msra.mxu0 0.0
        %1288 = vmatprep.subr.mxu0 0.0
        %1289 = vmatpush1.msra.mxu0 0.0
        %1290 = vmatprep.subr.mxu0 0.0
        %1291 = vmatpush1.msra.mxu0 0.0
        %1292 = vmatprep.subr.mxu0 0.0
        %1293 = vmatpush1.msra.mxu0 0.0
        %1294 = vmatprep.subr.mxu0 0.0
        %1295 = vmatpush1.msra.mxu0 0.0
        %1296 = vmatprep.subr.mxu0 0.0
        %1297 = vmatpush1.msra.mxu0 0.0
        %1298 = vmatprep.subr.mxu0 0.0
        %1299 = vmatpush1.msra.mxu0 0.0
        %1300 = vmatprep.subr.mxu0 0.0
        %1301 = vmatpush1.msra.mxu0 0.0
        %1302 = vmatprep.subr.mxu0 0.0
        %1303 = vmatpush1.msra.mxu0 0.0
        %1304 = vmatprep.subr.mxu0 0.0
        %1305 = vmatpush1.msra.mxu0 0.0
        %1306 = vmatprep.subr.mxu0 0.0
        %1307 = vmatpush1.msra.mxu0 0.0
        %1308 = vmatprep.subr.mxu0 0.0
        %1309 = vmatpush1.msra.mxu0 0.0
        %1310 = vmatprep.subr.mxu0 0.0
        %1311 = vmatpush1.msra.mxu0 0.0
        %1312 = vmatprep.subr.mxu0 0.0
        %1313 = vmatpush1.msra.mxu0 0.0
        %1314 = vmatprep.subr.mxu0 0.0
        %1315 = vmatpush1.msra.mxu0 0.0
        %1316 = vmatprep.subr.mxu0 0.0
        %1317 = vmatpush1.msra.mxu0 0.0
        %1318 = vmatprep.subr.mxu0 0.0
        %1319 = vmatpush1.msra.mxu0 0.0
        %1320 = vmatprep.subr.mxu0 0.0
        %1321 = vmatpush1.msra.mxu0 0.0
        %1322 = vmatprep.subr.mxu0 0.0
        %1323 = vmatpush1.msra.mxu0 0.0
        %1324 = vmatprep.subr.mxu0 0.0
        %1325 = vmatpush1.msra.mxu0 0.0
        %1326 = vmatprep.subr.mxu0 0.0
        %1327 = vmatpush1.msra.mxu0 0.0
        %1328 = vmatprep.subr.mxu0 0.0
        %1329 = vmatpush1.msra.mxu0 0.0
        %1330 = vmatprep.mubr.f32.mxu0 0.0
        %1331 = vmatmul.mubr.f32.gmra.mrb[0].mxu0 %v495
        %v1332 = vpop.f32.mrb[0].mxu0
        %v1333 = vadd.f32 %v1264, %v1332
        %v1334 = vpop.f32.mrb[0].mxu0
        %1335 = vdwg.mxu0
        %s1336 = scalar_lea.vmem [#allocation3], 24
        %1337 = vst.msk [vmem:[%s1336] sm:$0xff] %vm479, %v1333
        %s1338 = scalar_lea.vmem %s4, 352
        %v1339 = vld [vmem:[%s1338] sm:$0xff]
        %v1340 = vld [vmem:[%s1338 + $0x8] sm:$0xff]
        %v1341 = vld [vmem:[%s1338 + $0x10] sm:$0xff]
        %v1342 = vld [vmem:[%s1338 + $0x18] sm:$0xff]
        %s1343 = scalar_lea.vmem %s5, 11
        %v1344 = vld [vmem:[%s1343] sm:$0x1]
        %v1346 = vlaneseq
        %v1347 = vshrl.u32 %v1346, 7
        %v1348 = vsub.s32 0, %v1347
        %v1349 = vrot.slane %v1344, %v1348
        %1351 = vmatprep.subr.mxu0 0.0
        %1352 = vmatpush1.msra.mxu0 %v1339
        %1353 = vmatprep.subr.mxu0 0.0
        %1354 = vmatpush1.msra.mxu0 %v1340
        %1355 = vmatprep.subr.mxu0 0.0
        %1356 = vmatpush1.msra.mxu0 %v1341
        %1357 = vmatprep.subr.mxu0 0.0
        %1358 = vmatpush1.msra.mxu0 %v1342
        %1359 = vmatprep.subr.mxu0 0.0
        %1360 = vmatpush1.msra.mxu0 0.0
        %1361 = vmatprep.subr.mxu0 0.0
        %1362 = vmatpush1.msra.mxu0 0.0
        %1363 = vmatprep.subr.mxu0 0.0
        %1364 = vmatpush1.msra.mxu0 0.0
        %1365 = vmatprep.subr.mxu0 0.0
        %1366 = vmatpush1.msra.mxu0 0.0
        %1367 = vmatprep.subr.mxu0 0.0
        %1368 = vmatpush1.msra.mxu0 0.0
        %1369 = vmatprep.subr.mxu0 0.0
        %1370 = vmatpush1.msra.mxu0 0.0
        %1371 = vmatprep.subr.mxu0 0.0
        %1372 = vmatpush1.msra.mxu0 0.0
        %1373 = vmatprep.subr.mxu0 0.0
        %1374 = vmatpush1.msra.mxu0 0.0
        %1375 = vmatprep.subr.mxu0 0.0
        %1376 = vmatpush1.msra.mxu0 0.0
        %1377 = vmatprep.subr.mxu0 0.0
        %1378 = vmatpush1.msra.mxu0 0.0
        %1379 = vmatprep.subr.mxu0 0.0
        %1380 = vmatpush1.msra.mxu0 0.0
        %1381 = vmatprep.subr.mxu0 0.0
        %1382 = vmatpush1.msra.mxu0 0.0
        %1383 = vmatprep.subr.mxu0 0.0
        %1384 = vmatpush1.msra.mxu0 0.0
        %1385 = vmatprep.subr.mxu0 0.0
        %1386 = vmatpush1.msra.mxu0 0.0
        %1387 = vmatprep.subr.mxu0 0.0
        %1388 = vmatpush1.msra.mxu0 0.0
        %1389 = vmatprep.subr.mxu0 0.0
        %1390 = vmatpush1.msra.mxu0 0.0
        %1391 = vmatprep.subr.mxu0 0.0
        %1392 = vmatpush1.msra.mxu0 0.0
        %1393 = vmatprep.subr.mxu0 0.0
        %1394 = vmatpush1.msra.mxu0 0.0
        %1395 = vmatprep.subr.mxu0 0.0
        %1396 = vmatpush1.msra.mxu0 0.0
        %1397 = vmatprep.subr.mxu0 0.0
        %1398 = vmatpush1.msra.mxu0 0.0
        %1399 = vmatprep.subr.mxu0 0.0
        %1400 = vmatpush1.msra.mxu0 0.0
        %1401 = vmatprep.subr.mxu0 0.0
        %1402 = vmatpush1.msra.mxu0 0.0
        %1403 = vmatprep.subr.mxu0 0.0
        %1404 = vmatpush1.msra.mxu0 0.0
        %1405 = vmatprep.subr.mxu0 0.0
        %1406 = vmatpush1.msra.mxu0 0.0
        %1407 = vmatprep.subr.mxu0 0.0
        %1408 = vmatpush1.msra.mxu0 0.0
        %1409 = vmatprep.subr.mxu0 0.0
        %1410 = vmatpush1.msra.mxu0 0.0
        %1411 = vmatprep.subr.mxu0 0.0
        %1412 = vmatpush1.msra.mxu0 0.0
        %1413 = vmatprep.subr.mxu0 0.0
        %1414 = vmatpush1.msra.mxu0 0.0
        %1415 = vmatprep.mubr.f32.mxu0 0.0
        %1416 = vmatmul.mubr.f32.gmra.mrb[0].mxu0 %v582
        %v1417 = vpop.f32.mrb[0].mxu0
        %v1418 = vadd.f32 %v1349, %v1417
        %v1419 = vpop.f32.mrb[0].mxu0
        %1420 = vdwg.mxu0
        %s1421 = scalar_lea.vmem [#allocation4], 24
        %1422 = vst.msk [vmem:[%s1421] sm:$0xff] %vm479, %v1418
        %v1423 = vld [vmem:[#allocation2] sm:$0xff]
        %v1424 = vld [vmem:[#allocation2 + $0x8] sm:$0xff]
        %v1425 = vld [vmem:[#allocation2 + $0x10] sm:$0xff]
        %v1426 = vld [vmem:[#allocation2 + $0x18] sm:$0xff]
        %v1427 = vld [vmem:[#allocation3] sm:$0xff]
        %v1428 = vld [vmem:[#allocation3 + $0x8] sm:$0xff]
        %v1429 = vld [vmem:[#allocation3 + $0x10] sm:$0xff]
        %v1430 = vld [vmem:[#allocation3 + $0x18] sm:$0xff]
        %v1431 = vld [vmem:[#allocation4] sm:$0xff]
        %v1432 = vld [vmem:[#allocation4 + $0x8] sm:$0xff]
        %v1433 = vld [vmem:[#allocation4 + $0x10] sm:$0xff]
        %v1434 = vld [vmem:[#allocation4 + $0x18] sm:$0xff]
        %v1436 = vsel %vm479, %v1423, 0
        %v1439 = vsel %vm479, %v1427, 0
        %1441 = vmatprep.subr.mxu0 0.0
        %1442 = vmatpush1.xpose.msra.mxu0 %v1439
        %1443 = vmatprep.subr.mxu0 0.0
        %1444 = vmatpush1.xpose.msra.mxu0 0.0
        %1445 = vmatprep.subr.mxu0 0.0
        %1446 = vmatpush1.xpose.msra.mxu0 0.0
        %1447 = vmatprep.subr.mxu0 0.0
        %1448 = vmatpush1.xpose.msra.mxu0 0.0
        %1449 = vmatprep.subr.mxu0 0.0
        %1450 = vmatpush1.xpose.msra.mxu0 0.0
        %1451 = vmatprep.subr.mxu0 0.0
        %1452 = vmatpush1.xpose.msra.mxu0 0.0
        %1453 = vmatprep.subr.mxu0 0.0
        %1454 = vmatpush1.xpose.msra.mxu0 0.0
        %1455 = vmatprep.subr.mxu0 0.0
        %1456 = vmatpush1.xpose.msra.mxu0 0.0
        %1457 = vmatprep.subr.mxu0 0.0
        %1458 = vmatpush1.xpose.msra.mxu0 0.0
        %1459 = vmatprep.subr.mxu0 0.0
        %1460 = vmatpush1.xpose.msra.mxu0 0.0
        %1461 = vmatprep.subr.mxu0 0.0
        %1462 = vmatpush1.xpose.msra.mxu0 0.0
        %1463 = vmatprep.subr.mxu0 0.0
        %1464 = vmatpush1.xpose.msra.mxu0 0.0
        %1465 = vmatprep.subr.mxu0 0.0
        %1466 = vmatpush1.xpose.msra.mxu0 0.0
        %1467 = vmatprep.subr.mxu0 0.0
        %1468 = vmatpush1.xpose.msra.mxu0 0.0
        %1469 = vmatprep.subr.mxu0 0.0
        %1470 = vmatpush1.xpose.msra.mxu0 0.0
        %1471 = vmatprep.subr.mxu0 0.0
        %1472 = vmatpush1.xpose.msra.mxu0 0.0
        %1473 = vmatprep.subr.mxu0 0.0
        %1474 = vmatpush1.xpose.msra.mxu0 0.0
        %1475 = vmatprep.subr.mxu0 0.0
        %1476 = vmatpush1.xpose.msra.mxu0 0.0
        %1477 = vmatprep.subr.mxu0 0.0
        %1478 = vmatpush1.xpose.msra.mxu0 0.0
        %1479 = vmatprep.subr.mxu0 0.0
        %1480 = vmatpush1.xpose.msra.mxu0 0.0
        %1481 = vmatprep.subr.mxu0 0.0
        %1482 = vmatpush1.xpose.msra.mxu0 0.0
        %1483 = vmatprep.subr.mxu0 0.0
        %1484 = vmatpush1.xpose.msra.mxu0 0.0
        %1485 = vmatprep.subr.mxu0 0.0
        %1486 = vmatpush1.xpose.msra.mxu0 0.0
        %1487 = vmatprep.subr.mxu0 0.0
        %1488 = vmatpush1.xpose.msra.mxu0 0.0
        %1489 = vmatprep.subr.mxu0 0.0
        %1490 = vmatpush1.xpose.msra.mxu0 0.0
        %1491 = vmatprep.subr.mxu0 0.0
        %1492 = vmatpush1.xpose.msra.mxu0 0.0
        %1493 = vmatprep.subr.mxu0 0.0
        %1494 = vmatpush1.xpose.msra.mxu0 0.0
        %1495 = vmatprep.subr.mxu0 0.0
        %1496 = vmatpush1.xpose.msra.mxu0 0.0
        %1497 = vmatprep.subr.mxu0 0.0
        %1498 = vmatpush1.xpose.msra.mxu0 0.0
        %1499 = vmatprep.subr.mxu0 0.0
        %1500 = vmatpush1.xpose.msra.mxu0 0.0
        %1501 = vmatprep.subr.mxu0 0.0
        %1502 = vmatpush1.xpose.msra.mxu0 0.0
        %1503 = vmatprep.subr.mxu0 0.0
        %1504 = vmatpush1.xpose.msra.mxu0 0.0
        %1505 = vmatprep.mubr.f32.mxu0 0.0
        %1506 = vmatmul.mubr.f32.gmra.mrb[0].mxu0 %v1436
        %v1507 = vpop.f32.mrb[0].mxu0
        %v1508 = vadd.f32 0.0, %v1507
        %v1509 = vpop.f32.mrb[0].mxu0
        %1510 = vdwg.mxu0
        %v1512 = vsel %vm479, %v1424, 0
        %v1515 = vsel %vm479, %v1428, 0
        %1517 = vmatprep.subr.mxu0 0.0
        %1518 = vmatpush1.xpose.msra.mxu0 %v1515
        %1519 = vmatprep.subr.mxu0 0.0
        %1520 = vmatpush1.xpose.msra.mxu0 0.0
        %1521 = vmatprep.subr.mxu0 0.0
        %1522 = vmatpush1.xpose.msra.mxu0 0.0
        %1523 = vmatprep.subr.mxu0 0.0
        %1524 = vmatpush1.xpose.msra.mxu0 0.0
        %1525 = vmatprep.subr.mxu0 0.0
        %1526 = vmatpush1.xpose.msra.mxu0 0.0
        %1527 = vmatprep.subr.mxu0 0.0
        %1528 = vmatpush1.xpose.msra.mxu0 0.0
        %1529 = vmatprep.subr.mxu0 0.0
        %1530 = vmatpush1.xpose.msra.mxu0 0.0
        %1531 = vmatprep.subr.mxu0 0.0
        %1532 = vmatpush1.xpose.msra.mxu0 0.0
        %1533 = vmatprep.subr.mxu0 0.0
        %1534 = vmatpush1.xpose.msra.mxu0 0.0
        %1535 = vmatprep.subr.mxu0 0.0
        %1536 = vmatpush1.xpose.msra.mxu0 0.0
        %1537 = vmatprep.subr.mxu0 0.0
        %1538 = vmatpush1.xpose.msra.mxu0 0.0
        %1539 = vmatprep.subr.mxu0 0.0
        %1540 = vmatpush1.xpose.msra.mxu0 0.0
        %1541 = vmatprep.subr.mxu0 0.0
        %1542 = vmatpush1.xpose.msra.mxu0 0.0
        %1543 = vmatprep.subr.mxu0 0.0
        %1544 = vmatpush1.xpose.msra.mxu0 0.0
        %1545 = vmatprep.subr.mxu0 0.0
        %1546 = vmatpush1.xpose.msra.mxu0 0.0
        %1547 = vmatprep.subr.mxu0 0.0
        %1548 = vmatpush1.xpose.msra.mxu0 0.0
        %1549 = vmatprep.subr.mxu0 0.0
        %1550 = vmatpush1.xpose.msra.mxu0 0.0
        %1551 = vmatprep.subr.mxu0 0.0
        %1552 = vmatpush1.xpose.msra.mxu0 0.0
        %1553 = vmatprep.subr.mxu0 0.0
        %1554 = vmatpush1.xpose.msra.mxu0 0.0
        %1555 = vmatprep.subr.mxu0 0.0
        %1556 = vmatpush1.xpose.msra.mxu0 0.0
        %1557 = vmatprep.subr.mxu0 0.0
        %1558 = vmatpush1.xpose.msra.mxu0 0.0
        %1559 = vmatprep.subr.mxu0 0.0
        %1560 = vmatpush1.xpose.msra.mxu0 0.0
        %1561 = vmatprep.subr.mxu0 0.0
        %1562 = vmatpush1.xpose.msra.mxu0 0.0
        %1563 = vmatprep.subr.mxu0 0.0
        %1564 = vmatpush1.xpose.msra.mxu0 0.0
        %1565 = vmatprep.subr.mxu0 0.0
        %1566 = vmatpush1.xpose.msra.mxu0 0.0
        %1567 = vmatprep.subr.mxu0 0.0
        %1568 = vmatpush1.xpose.msra.mxu0 0.0
        %1569 = vmatprep.subr.mxu0 0.0
        %1570 = vmatpush1.xpose.msra.mxu0 0.0
        %1571 = vmatprep.subr.mxu0 0.0
        %1572 = vmatpush1.xpose.msra.mxu0 0.0
        %1573 = vmatprep.subr.mxu0 0.0
        %1574 = vmatpush1.xpose.msra.mxu0 0.0
        %1575 = vmatprep.subr.mxu0 0.0
        %1576 = vmatpush1.xpose.msra.mxu0 0.0
        %1577 = vmatprep.subr.mxu0 0.0
        %1578 = vmatpush1.xpose.msra.mxu0 0.0
        %1579 = vmatprep.subr.mxu0 0.0
        %1580 = vmatpush1.xpose.msra.mxu0 0.0
        %1581 = vmatprep.mubr.f32.mxu0 0.0
        %1582 = vmatmul.mubr.f32.gmra.mrb[0].mxu0 %v1512
        %v1583 = vpop.f32.mrb[0].mxu0
        %v1584 = vadd.f32 0.0, %v1583
        %v1585 = vpop.f32.mrb[0].mxu0
        %1586 = vdwg.mxu0
        %v1588 = vsel %vm479, %v1425, 0
        %v1591 = vsel %vm479, %v1429, 0
        %1593 = vmatprep.subr.mxu0 0.0
        %1594 = vmatpush1.xpose.msra.mxu0 %v1591
        %1595 = vmatprep.subr.mxu0 0.0
        %1596 = vmatpush1.xpose.msra.mxu0 0.0
        %1597 = vmatprep.subr.mxu0 0.0
        %1598 = vmatpush1.xpose.msra.mxu0 0.0
        %1599 = vmatprep.subr.mxu0 0.0
        %1600 = vmatpush1.xpose.msra.mxu0 0.0
        %1601 = vmatprep.subr.mxu0 0.0
        %1602 = vmatpush1.xpose.msra.mxu0 0.0
        %1603 = vmatprep.subr.mxu0 0.0
        %1604 = vmatpush1.xpose.msra.mxu0 0.0
        %1605 = vmatprep.subr.mxu0 0.0
        %1606 = vmatpush1.xpose.msra.mxu0 0.0
        %1607 = vmatprep.subr.mxu0 0.0
        %1608 = vmatpush1.xpose.msra.mxu0 0.0
        %1609 = vmatprep.subr.mxu0 0.0
        %1610 = vmatpush1.xpose.msra.mxu0 0.0
        %1611 = vmatprep.subr.mxu0 0.0
        %1612 = vmatpush1.xpose.msra.mxu0 0.0
        %1613 = vmatprep.subr.mxu0 0.0
        %1614 = vmatpush1.xpose.msra.mxu0 0.0
        %1615 = vmatprep.subr.mxu0 0.0
        %1616 = vmatpush1.xpose.msra.mxu0 0.0
        %1617 = vmatprep.subr.mxu0 0.0
        %1618 = vmatpush1.xpose.msra.mxu0 0.0
        %1619 = vmatprep.subr.mxu0 0.0
        %1620 = vmatpush1.xpose.msra.mxu0 0.0
        %1621 = vmatprep.subr.mxu0 0.0
        %1622 = vmatpush1.xpose.msra.mxu0 0.0
        %1623 = vmatprep.subr.mxu0 0.0
        %1624 = vmatpush1.xpose.msra.mxu0 0.0
        %1625 = vmatprep.subr.mxu0 0.0
        %1626 = vmatpush1.xpose.msra.mxu0 0.0
        %1627 = vmatprep.subr.mxu0 0.0
        %1628 = vmatpush1.xpose.msra.mxu0 0.0
        %1629 = vmatprep.subr.mxu0 0.0
        %1630 = vmatpush1.xpose.msra.mxu0 0.0
        %1631 = vmatprep.subr.mxu0 0.0
        %1632 = vmatpush1.xpose.msra.mxu0 0.0
        %1633 = vmatprep.subr.mxu0 0.0
        %1634 = vmatpush1.xpose.msra.mxu0 0.0
        %1635 = vmatprep.subr.mxu0 0.0
        %1636 = vmatpush1.xpose.msra.mxu0 0.0
        %1637 = vmatprep.subr.mxu0 0.0
        %1638 = vmatpush1.xpose.msra.mxu0 0.0
        %1639 = vmatprep.subr.mxu0 0.0
        %1640 = vmatpush1.xpose.msra.mxu0 0.0
        %1641 = vmatprep.subr.mxu0 0.0
        %1642 = vmatpush1.xpose.msra.mxu0 0.0
        %1643 = vmatprep.subr.mxu0 0.0
        %1644 = vmatpush1.xpose.msra.mxu0 0.0
        %1645 = vmatprep.subr.mxu0 0.0
        %1646 = vmatpush1.xpose.msra.mxu0 0.0
        %1647 = vmatprep.subr.mxu0 0.0
        %1648 = vmatpush1.xpose.msra.mxu0 0.0
        %1649 = vmatprep.subr.mxu0 0.0
        %1650 = vmatpush1.xpose.msra.mxu0 0.0
        %1651 = vmatprep.subr.mxu0 0.0
        %1652 = vmatpush1.xpose.msra.mxu0 0.0
        %1653 = vmatprep.subr.mxu0 0.0
        %1654 = vmatpush1.xpose.msra.mxu0 0.0
        %1655 = vmatprep.subr.mxu0 0.0
        %1656 = vmatpush1.xpose.msra.mxu0 0.0
        %1657 = vmatprep.mubr.f32.mxu0 0.0
        %1658 = vmatmul.mubr.f32.gmra.mrb[0].mxu0 %v1588
        %v1659 = vpop.f32.mrb[0].mxu0
        %v1660 = vadd.f32 0.0, %v1659
        %v1661 = vpop.f32.mrb[0].mxu0
        %1662 = vdwg.mxu0
        %v1664 = vsel %vm479, %v1426, 0
        %v1667 = vsel %vm479, %v1430, 0
        %1669 = vmatprep.subr.mxu0 0.0
        %1670 = vmatpush1.xpose.msra.mxu0 %v1667
        %1671 = vmatprep.subr.mxu0 0.0
        %1672 = vmatpush1.xpose.msra.mxu0 0.0
        %1673 = vmatprep.subr.mxu0 0.0
        %1674 = vmatpush1.xpose.msra.mxu0 0.0
        %1675 = vmatprep.subr.mxu0 0.0
        %1676 = vmatpush1.xpose.msra.mxu0 0.0
        %1677 = vmatprep.subr.mxu0 0.0
        %1678 = vmatpush1.xpose.msra.mxu0 0.0
        %1679 = vmatprep.subr.mxu0 0.0
        %1680 = vmatpush1.xpose.msra.mxu0 0.0
        %1681 = vmatprep.subr.mxu0 0.0
        %1682 = vmatpush1.xpose.msra.mxu0 0.0
        %1683 = vmatprep.subr.mxu0 0.0
        %1684 = vmatpush1.xpose.msra.mxu0 0.0
        %1685 = vmatprep.subr.mxu0 0.0
        %1686 = vmatpush1.xpose.msra.mxu0 0.0
        %1687 = vmatprep.subr.mxu0 0.0
        %1688 = vmatpush1.xpose.msra.mxu0 0.0
        %1689 = vmatprep.subr.mxu0 0.0
        %1690 = vmatpush1.xpose.msra.mxu0 0.0
        %1691 = vmatprep.subr.mxu0 0.0
        %1692 = vmatpush1.xpose.msra.mxu0 0.0
        %1693 = vmatprep.subr.mxu0 0.0
        %1694 = vmatpush1.xpose.msra.mxu0 0.0
        %1695 = vmatprep.subr.mxu0 0.0
        %1696 = vmatpush1.xpose.msra.mxu0 0.0
        %1697 = vmatprep.subr.mxu0 0.0
        %1698 = vmatpush1.xpose.msra.mxu0 0.0
        %1699 = vmatprep.subr.mxu0 0.0
        %1700 = vmatpush1.xpose.msra.mxu0 0.0
        %1701 = vmatprep.subr.mxu0 0.0
        %1702 = vmatpush1.xpose.msra.mxu0 0.0
        %1703 = vmatprep.subr.mxu0 0.0
        %1704 = vmatpush1.xpose.msra.mxu0 0.0
        %1705 = vmatprep.subr.mxu0 0.0
        %1706 = vmatpush1.xpose.msra.mxu0 0.0
        %1707 = vmatprep.subr.mxu0 0.0
        %1708 = vmatpush1.xpose.msra.mxu0 0.0
        %1709 = vmatprep.subr.mxu0 0.0
        %1710 = vmatpush1.xpose.msra.mxu0 0.0
        %1711 = vmatprep.subr.mxu0 0.0
        %1712 = vmatpush1.xpose.msra.mxu0 0.0
        %1713 = vmatprep.subr.mxu0 0.0
        %1714 = vmatpush1.xpose.msra.mxu0 0.0
        %1715 = vmatprep.subr.mxu0 0.0
        %1716 = vmatpush1.xpose.msra.mxu0 0.0
        %1717 = vmatprep.subr.mxu0 0.0
        %1718 = vmatpush1.xpose.msra.mxu0 0.0
        %1719 = vmatprep.subr.mxu0 0.0
        %1720 = vmatpush1.xpose.msra.mxu0 0.0
        %1721 = vmatprep.subr.mxu0 0.0
        %1722 = vmatpush1.xpose.msra.mxu0 0.0
        %1723 = vmatprep.subr.mxu0 0.0
        %1724 = vmatpush1.xpose.msra.mxu0 0.0
        %1725 = vmatprep.subr.mxu0 0.0
        %1726 = vmatpush1.xpose.msra.mxu0 0.0
        %1727 = vmatprep.subr.mxu0 0.0
        %1728 = vmatpush1.xpose.msra.mxu0 0.0
        %1729 = vmatprep.subr.mxu0 0.0
        %1730 = vmatpush1.xpose.msra.mxu0 0.0
        %1731 = vmatprep.subr.mxu0 0.0
        %1732 = vmatpush1.xpose.msra.mxu0 0.0
        %1733 = vmatprep.mubr.f32.mxu0 0.0
        %1734 = vmatmul.mubr.f32.gmra.mrb[0].mxu0 %v1664
        %v1735 = vpop.f32.mrb[0].mxu0
        %v1736 = vadd.f32 0.0, %v1735
        %v1737 = vpop.f32.mrb[0].mxu0
        %1738 = vdwg.mxu0
        %v1739 = vld [vmem:[%s389] sm:$0xff]
        %vm1740 = vcmp.eq.f32.partialorder %v1739, 0.0
        %v1741 = vsel %vm1740, 1, 0
        %vm1742 = vcmp.eq.s32.totalorder %v1741, 1
        %v1743 = vsel %vm1742, -1e+10, %v1508
        %v1744 = vsel %vm1742, -1e+10, %v1584
        %v1745 = vsel %vm1742, -1e+10, %v1660
        %v1746 = vsel %vm1742, -1e+10, %v1736
        %v1747 = vsel %vm479, %v1743, -inf
        %1748 = vmax.xlane.f32.xlu0 %v1747
        %v1749 = vpop.xlane.xlu0 %1748
        %v1750 = vsel %vm479, %v1744, -inf
        %1751 = vmax.xlane.f32.xlu0 %v1750
        %v1752 = vpop.xlane.xlu0 %1751
        %v1753 = vsel %vm479, %v1745, -inf
        %1754 = vmax.xlane.f32.xlu0 %v1753
        %v1755 = vpop.xlane.xlu0 %1754
        %v1756 = vsel %vm479, %v1746, -inf
        %1757 = vmax.xlane.f32.xlu0 %v1756
        %v1758 = vpop.xlane.xlu0 %1757
        %v1759 = vsub.f32 %v1743, %v1749
        %v1760 = vsub.f32 %v1744, %v1752
        %v1761 = vsub.f32 %v1745, %v1755
        %v1762 = vsub.f32 %v1746, %v1758
        %v1763 = vmul.f32 %v1759, 1.442695
        %v1764 = vpow.pop %v1763
        %v1765 = vmul.f32 %v1760, 1.442695
        %v1766 = vpow.pop %v1765
        %v1767 = vmul.f32 %v1761, 1.442695
        %v1768 = vpow.pop %v1767
        %v1769 = vmul.f32 %v1762, 1.442695
        %v1770 = vpow.pop %v1769
        %v1771 = vsel %vm479, %v1764, 0.0
        %1772 = vadd.xlane.f32.xlu0 %v1771
        %v1773 = vpop.xlane.xlu0 %1772
        %v1774 = vsel %vm479, %v1766, 0.0
        %1775 = vadd.xlane.f32.xlu0 %v1774
        %v1776 = vpop.xlane.xlu0 %1775
        %v1777 = vsel %vm479, %v1768, 0.0
        %1778 = vadd.xlane.f32.xlu0 %v1777
        %v1779 = vpop.xlane.xlu0 %1778
        %v1780 = vsel %vm479, %v1770, 0.0
        %1781 = vadd.xlane.f32.xlu0 %v1780
        %v1782 = vpop.xlane.xlu0 %1781
        %v1783 = vrcp.pop %v1773
        %v1784 = vrcp.pop %v1776
        %v1785 = vrcp.pop %v1779
        %v1786 = vrcp.pop %v1782
        %v1787 = vmul.f32 %v1764, %v1783
        %v1788 = vmul.f32 %v1766, %v1784
        %v1789 = vmul.f32 %v1768, %v1785
        %v1790 = vmul.f32 %v1770, %v1786
        %1791 = vst.msk [vmem:[%s373] sm:$0xff] %vm479, %v1787
        %1792 = vst.msk [vmem:[%s373 + $0x8] sm:$0xff] %vm479, %v1788
        %1793 = vst.msk [vmem:[%s373 + $0x10] sm:$0xff] %vm479, %v1789
        %1794 = vst.msk [vmem:[%s373 + $0x18] sm:$0xff] %vm479, %v1790
        %v1796 = vsel %vm479, %v1787, 0
        %1798 = vmatprep.subr.mxu0 0.0
        %1799 = vmatpush1.msra.mxu0 %v1431
        %1800 = vmatprep.subr.mxu0 0.0
        %1801 = vmatpush1.msra.mxu0 0.0
        %1802 = vmatprep.subr.mxu0 0.0
        %1803 = vmatpush1.msra.mxu0 0.0
        %1804 = vmatprep.subr.mxu0 0.0
        %1805 = vmatpush1.msra.mxu0 0.0
        %1806 = vmatprep.subr.mxu0 0.0
        %1807 = vmatpush1.msra.mxu0 0.0
        %1808 = vmatprep.subr.mxu0 0.0
        %1809 = vmatpush1.msra.mxu0 0.0
        %1810 = vmatprep.subr.mxu0 0.0
        %1811 = vmatpush1.msra.mxu0 0.0
        %1812 = vmatprep.subr.mxu0 0.0
        %1813 = vmatpush1.msra.mxu0 0.0
        %1814 = vmatprep.subr.mxu0 0.0
        %1815 = vmatpush1.msra.mxu0 0.0
        %1816 = vmatprep.subr.mxu0 0.0
        %1817 = vmatpush1.msra.mxu0 0.0
        %1818 = vmatprep.subr.mxu0 0.0
        %1819 = vmatpush1.msra.mxu0 0.0
        %1820 = vmatprep.subr.mxu0 0.0
        %1821 = vmatpush1.msra.mxu0 0.0
        %1822 = vmatprep.subr.mxu0 0.0
        %1823 = vmatpush1.msra.mxu0 0.0
        %1824 = vmatprep.subr.mxu0 0.0
        %1825 = vmatpush1.msra.mxu0 0.0
        %1826 = vmatprep.subr.mxu0 0.0
        %1827 = vmatpush1.msra.mxu0 0.0
        %1828 = vmatprep.subr.mxu0 0.0
        %1829 = vmatpush1.msra.mxu0 0.0
        %1830 = vmatprep.subr.mxu0 0.0
        %1831 = vmatpush1.msra.mxu0 0.0
        %1832 = vmatprep.subr.mxu0 0.0
        %1833 = vmatpush1.msra.mxu0 0.0
        %1834 = vmatprep.subr.mxu0 0.0
        %1835 = vmatpush1.msra.mxu0 0.0
        %1836 = vmatprep.subr.mxu0 0.0
        %1837 = vmatpush1.msra.mxu0 0.0
        %1838 = vmatprep.subr.mxu0 0.0
        %1839 = vmatpush1.msra.mxu0 0.0
        %1840 = vmatprep.subr.mxu0 0.0
        %1841 = vmatpush1.msra.mxu0 0.0
        %1842 = vmatprep.subr.mxu0 0.0
        %1843 = vmatpush1.msra.mxu0 0.0
        %1844 = vmatprep.subr.mxu0 0.0
        %1845 = vmatpush1.msra.mxu0 0.0
        %1846 = vmatprep.subr.mxu0 0.0
        %1847 = vmatpush1.msra.mxu0 0.0
        %1848 = vmatprep.subr.mxu0 0.0
        %1849 = vmatpush1.msra.mxu0 0.0
        %1850 = vmatprep.subr.mxu0 0.0
        %1851 = vmatpush1.msra.mxu0 0.0
        %1852 = vmatprep.subr.mxu0 0.0
        %1853 = vmatpush1.msra.mxu0 0.0
        %1854 = vmatprep.subr.mxu0 0.0
        %1855 = vmatpush1.msra.mxu0 0.0
        %1856 = vmatprep.subr.mxu0 0.0
        %1857 = vmatpush1.msra.mxu0 0.0
        %1858 = vmatprep.subr.mxu0 0.0
        %1859 = vmatpush1.msra.mxu0 0.0
        %1860 = vmatprep.subr.mxu0 0.0
        %1861 = vmatpush1.msra.mxu0 0.0
        %1862 = vmatprep.mubr.f32.mxu0 0.0
        %1863 = vmatmul.mubr.f32.gmra.mrb[0].mxu0 %v1796
        %v1864 = vpop.f32.mrb[0].mxu0
        %v1865 = vadd.f32 0.0, %v1864
        %v1866 = vpop.f32.mrb[0].mxu0
        %1867 = vdwg.mxu0
        %v1869 = vsel %vm479, %v1788, 0
        %1871 = vmatprep.subr.mxu0 0.0
        %1872 = vmatpush1.msra.mxu0 %v1432
        %1873 = vmatprep.subr.mxu0 0.0
        %1874 = vmatpush1.msra.mxu0 0.0
        %1875 = vmatprep.subr.mxu0 0.0
        %1876 = vmatpush1.msra.mxu0 0.0
        %1877 = vmatprep.subr.mxu0 0.0
        %1878 = vmatpush1.msra.mxu0 0.0
        %1879 = vmatprep.subr.mxu0 0.0
        %1880 = vmatpush1.msra.mxu0 0.0
        %1881 = vmatprep.subr.mxu0 0.0
        %1882 = vmatpush1.msra.mxu0 0.0
        %1883 = vmatprep.subr.mxu0 0.0
        %1884 = vmatpush1.msra.mxu0 0.0
        %1885 = vmatprep.subr.mxu0 0.0
        %1886 = vmatpush1.msra.mxu0 0.0
        %1887 = vmatprep.subr.mxu0 0.0
        %1888 = vmatpush1.msra.mxu0 0.0
        %1889 = vmatprep.subr.mxu0 0.0
        %1890 = vmatpush1.msra.mxu0 0.0
        %1891 = vmatprep.subr.mxu0 0.0
        %1892 = vmatpush1.msra.mxu0 0.0
        %1893 = vmatprep.subr.mxu0 0.0
        %1894 = vmatpush1.msra.mxu0 0.0
        %1895 = vmatprep.subr.mxu0 0.0
        %1896 = vmatpush1.msra.mxu0 0.0
        %1897 = vmatprep.subr.mxu0 0.0
        %1898 = vmatpush1.msra.mxu0 0.0
        %1899 = vmatprep.subr.mxu0 0.0
        %1900 = vmatpush1.msra.mxu0 0.0
        %1901 = vmatprep.subr.mxu0 0.0
        %1902 = vmatpush1.msra.mxu0 0.0
        %1903 = vmatprep.subr.mxu0 0.0
        %1904 = vmatpush1.msra.mxu0 0.0
        %1905 = vmatprep.subr.mxu0 0.0
        %1906 = vmatpush1.msra.mxu0 0.0
        %1907 = vmatprep.subr.mxu0 0.0
        %1908 = vmatpush1.msra.mxu0 0.0
        %1909 = vmatprep.subr.mxu0 0.0
        %1910 = vmatpush1.msra.mxu0 0.0
        %1911 = vmatprep.subr.mxu0 0.0
        %1912 = vmatpush1.msra.mxu0 0.0
        %1913 = vmatprep.subr.mxu0 0.0
        %1914 = vmatpush1.msra.mxu0 0.0
        %1915 = vmatprep.subr.mxu0 0.0
        %1916 = vmatpush1.msra.mxu0 0.0
        %1917 = vmatprep.subr.mxu0 0.0
        %1918 = vmatpush1.msra.mxu0 0.0
        %1919 = vmatprep.subr.mxu0 0.0
        %1920 = vmatpush1.msra.mxu0 0.0
        %1921 = vmatprep.subr.mxu0 0.0
        %1922 = vmatpush1.msra.mxu0 0.0
        %1923 = vmatprep.subr.mxu0 0.0
        %1924 = vmatpush1.msra.mxu0 0.0
        %1925 = vmatprep.subr.mxu0 0.0
        %1926 = vmatpush1.msra.mxu0 0.0
        %1927 = vmatprep.subr.mxu0 0.0
        %1928 = vmatpush1.msra.mxu0 0.0
        %1929 = vmatprep.subr.mxu0 0.0
        %1930 = vmatpush1.msra.mxu0 0.0
        %1931 = vmatprep.subr.mxu0 0.0
        %1932 = vmatpush1.msra.mxu0 0.0
        %1933 = vmatprep.subr.mxu0 0.0
        %1934 = vmatpush1.msra.mxu0 0.0
        %1935 = vmatprep.mubr.f32.mxu0 0.0
        %1936 = vmatmul.mubr.f32.gmra.mrb[0].mxu0 %v1869
        %v1937 = vpop.f32.mrb[0].mxu0
        %v1938 = vadd.f32 0.0, %v1937
        %v1939 = vpop.f32.mrb[0].mxu0
        %1940 = vdwg.mxu0
        %v1942 = vsel %vm479, %v1789, 0
        %1944 = vmatprep.subr.mxu0 0.0
        %1945 = vmatpush1.msra.mxu0 %v1433
        %1946 = vmatprep.subr.mxu0 0.0
        %1947 = vmatpush1.msra.mxu0 0.0
        %1948 = vmatprep.subr.mxu0 0.0
        %1949 = vmatpush1.msra.mxu0 0.0
        %1950 = vmatprep.subr.mxu0 0.0
        %1951 = vmatpush1.msra.mxu0 0.0
        %1952 = vmatprep.subr.mxu0 0.0
        %1953 = vmatpush1.msra.mxu0 0.0
        %1954 = vmatprep.subr.mxu0 0.0
        %1955 = vmatpush1.msra.mxu0 0.0
        %1956 = vmatprep.subr.mxu0 0.0
        %1957 = vmatpush1.msra.mxu0 0.0
        %1958 = vmatprep.subr.mxu0 0.0
        %1959 = vmatpush1.msra.mxu0 0.0
        %1960 = vmatprep.subr.mxu0 0.0
        %1961 = vmatpush1.msra.mxu0 0.0
        %1962 = vmatprep.subr.mxu0 0.0
        %1963 = vmatpush1.msra.mxu0 0.0
        %1964 = vmatprep.subr.mxu0 0.0
        %1965 = vmatpush1.msra.mxu0 0.0
        %1966 = vmatprep.subr.mxu0 0.0
        %1967 = vmatpush1.msra.mxu0 0.0
        %1968 = vmatprep.subr.mxu0 0.0
        %1969 = vmatpush1.msra.mxu0 0.0
        %1970 = vmatprep.subr.mxu0 0.0
        %1971 = vmatpush1.msra.mxu0 0.0
        %1972 = vmatprep.subr.mxu0 0.0
        %1973 = vmatpush1.msra.mxu0 0.0
        %1974 = vmatprep.subr.mxu0 0.0
        %1975 = vmatpush1.msra.mxu0 0.0
        %1976 = vmatprep.subr.mxu0 0.0
        %1977 = vmatpush1.msra.mxu0 0.0
        %1978 = vmatprep.subr.mxu0 0.0
        %1979 = vmatpush1.msra.mxu0 0.0
        %1980 = vmatprep.subr.mxu0 0.0
        %1981 = vmatpush1.msra.mxu0 0.0
        %1982 = vmatprep.subr.mxu0 0.0
        %1983 = vmatpush1.msra.mxu0 0.0
        %1984 = vmatprep.subr.mxu0 0.0
        %1985 = vmatpush1.msra.mxu0 0.0
        %1986 = vmatprep.subr.mxu0 0.0
        %1987 = vmatpush1.msra.mxu0 0.0
        %1988 = vmatprep.subr.mxu0 0.0
        %1989 = vmatpush1.msra.mxu0 0.0
        %1990 = vmatprep.subr.mxu0 0.0
        %1991 = vmatpush1.msra.mxu0 0.0
        %1992 = vmatprep.subr.mxu0 0.0
        %1993 = vmatpush1.msra.mxu0 0.0
        %1994 = vmatprep.subr.mxu0 0.0
        %1995 = vmatpush1.msra.mxu0 0.0
        %1996 = vmatprep.subr.mxu0 0.0
        %1997 = vmatpush1.msra.mxu0 0.0
        %1998 = vmatprep.subr.mxu0 0.0
        %1999 = vmatpush1.msra.mxu0 0.0
        %2000 = vmatprep.subr.mxu0 0.0
        %2001 = vmatpush1.msra.mxu0 0.0
        %2002 = vmatprep.subr.mxu0 0.0
        %2003 = vmatpush1.msra.mxu0 0.0
        %2004 = vmatprep.subr.mxu0 0.0
        %2005 = vmatpush1.msra.mxu0 0.0
        %2006 = vmatprep.subr.mxu0 0.0
        %2007 = vmatpush1.msra.mxu0 0.0
        %2008 = vmatprep.mubr.f32.mxu0 0.0
        %2009 = vmatmul.mubr.f32.gmra.mrb[0].mxu0 %v1942
        %v2010 = vpop.f32.mrb[0].mxu0
        %v2011 = vadd.f32 0.0, %v2010
        %v2012 = vpop.f32.mrb[0].mxu0
        %2013 = vdwg.mxu0
        %v2015 = vsel %vm479, %v1790, 0
        %2017 = vmatprep.subr.mxu0 0.0
        %2018 = vmatpush1.msra.mxu0 %v1434
        %2019 = vmatprep.subr.mxu0 0.0
        %2020 = vmatpush1.msra.mxu0 0.0
        %2021 = vmatprep.subr.mxu0 0.0
        %2022 = vmatpush1.msra.mxu0 0.0
        %2023 = vmatprep.subr.mxu0 0.0
        %2024 = vmatpush1.msra.mxu0 0.0
        %2025 = vmatprep.subr.mxu0 0.0
        %2026 = vmatpush1.msra.mxu0 0.0
        %2027 = vmatprep.subr.mxu0 0.0
        %2028 = vmatpush1.msra.mxu0 0.0
        %2029 = vmatprep.subr.mxu0 0.0
        %2030 = vmatpush1.msra.mxu0 0.0
        %2031 = vmatprep.subr.mxu0 0.0
        %2032 = vmatpush1.msra.mxu0 0.0
        %2033 = vmatprep.subr.mxu0 0.0
        %2034 = vmatpush1.msra.mxu0 0.0
        %2035 = vmatprep.subr.mxu0 0.0
        %2036 = vmatpush1.msra.mxu0 0.0
        %2037 = vmatprep.subr.mxu0 0.0
        %2038 = vmatpush1.msra.mxu0 0.0
        %2039 = vmatprep.subr.mxu0 0.0
        %2040 = vmatpush1.msra.mxu0 0.0
        %2041 = vmatprep.subr.mxu0 0.0
        %2042 = vmatpush1.msra.mxu0 0.0
        %2043 = vmatprep.subr.mxu0 0.0
        %2044 = vmatpush1.msra.mxu0 0.0
        %2045 = vmatprep.subr.mxu0 0.0
        %2046 = vmatpush1.msra.mxu0 0.0
        %2047 = vmatprep.subr.mxu0 0.0
        %2048 = vmatpush1.msra.mxu0 0.0
        %2049 = vmatprep.subr.mxu0 0.0
        %2050 = vmatpush1.msra.mxu0 0.0
        %2051 = vmatprep.subr.mxu0 0.0
        %2052 = vmatpush1.msra.mxu0 0.0
        %2053 = vmatprep.subr.mxu0 0.0
        %2054 = vmatpush1.msra.mxu0 0.0
        %2055 = vmatprep.subr.mxu0 0.0
        %2056 = vmatpush1.msra.mxu0 0.0
        %2057 = vmatprep.subr.mxu0 0.0
        %2058 = vmatpush1.msra.mxu0 0.0
        %2059 = vmatprep.subr.mxu0 0.0
        %2060 = vmatpush1.msra.mxu0 0.0
        %2061 = vmatprep.subr.mxu0 0.0
        %2062 = vmatpush1.msra.mxu0 0.0
        %2063 = vmatprep.subr.mxu0 0.0
        %2064 = vmatpush1.msra.mxu0 0.0
        %2065 = vmatprep.subr.mxu0 0.0
        %2066 = vmatpush1.msra.mxu0 0.0
        %2067 = vmatprep.subr.mxu0 0.0
        %2068 = vmatpush1.msra.mxu0 0.0
        %2069 = vmatprep.subr.mxu0 0.0
        %2070 = vmatpush1.msra.mxu0 0.0
        %2071 = vmatprep.subr.mxu0 0.0
        %2072 = vmatpush1.msra.mxu0 0.0
        %2073 = vmatprep.subr.mxu0 0.0
        %2074 = vmatpush1.msra.mxu0 0.0
        %2075 = vmatprep.subr.mxu0 0.0
        %2076 = vmatpush1.msra.mxu0 0.0
        %2077 = vmatprep.subr.mxu0 0.0
        %2078 = vmatpush1.msra.mxu0 0.0
        %2079 = vmatprep.subr.mxu0 0.0
        %2080 = vmatpush1.msra.mxu0 0.0
        %2081 = vmatprep.mubr.f32.mxu0 0.0
        %2082 = vmatmul.mubr.f32.gmra.mrb[0].mxu0 %v2015
        %v2083 = vpop.f32.mrb[0].mxu0
        %v2084 = vadd.f32 0.0, %v2083
        %v2085 = vpop.f32.mrb[0].mxu0
        %2086 = vdwg.mxu0
        %v2087 = vld [vmem:[%s6] sm:$0xff]
        %s2088 = scalar_lea.vmem %s6, 8
        %v2089 = vld [vmem:[%s2088] sm:$0xff]
        %v2091 = vsel %vm479, %v1938, 0
        %2093 = vmatprep.subr.mxu0 0.0
        %2094 = vmatpush1.msra.mxu0 %v2089
        %2095 = vmatprep.subr.mxu0 0.0
        %2096 = vmatpush1.msra.mxu0 0.0
        %2097 = vmatprep.subr.mxu0 0.0
        %2098 = vmatpush1.msra.mxu0 0.0
        %2099 = vmatprep.subr.mxu0 0.0
        %2100 = vmatpush1.msra.mxu0 0.0
        %2101 = vmatprep.subr.mxu0 0.0
        %2102 = vmatpush1.msra.mxu0 0.0
        %2103 = vmatprep.subr.mxu0 0.0
        %2104 = vmatpush1.msra.mxu0 0.0
        %2105 = vmatprep.subr.mxu0 0.0
        %2106 = vmatpush1.msra.mxu0 0.0
        %2107 = vmatprep.subr.mxu0 0.0
        %2108 = vmatpush1.msra.mxu0 0.0
        %2109 = vmatprep.subr.mxu0 0.0
        %2110 = vmatpush1.msra.mxu0 0.0
        %2111 = vmatprep.subr.mxu0 0.0
        %2112 = vmatpush1.msra.mxu0 0.0
        %2113 = vmatprep.subr.mxu0 0.0
        %2114 = vmatpush1.msra.mxu0 0.0
        %2115 = vmatprep.subr.mxu0 0.0
        %2116 = vmatpush1.msra.mxu0 0.0
        %2117 = vmatprep.subr.mxu0 0.0
        %2118 = vmatpush1.msra.mxu0 0.0
        %2119 = vmatprep.subr.mxu0 0.0
        %2120 = vmatpush1.msra.mxu0 0.0
        %2121 = vmatprep.subr.mxu0 0.0
        %2122 = vmatpush1.msra.mxu0 0.0
        %2123 = vmatprep.subr.mxu0 0.0
        %2124 = vmatpush1.msra.mxu0 0.0
        %2125 = vmatprep.subr.mxu0 0.0
        %2126 = vmatpush1.msra.mxu0 0.0
        %2127 = vmatprep.subr.mxu0 0.0
        %2128 = vmatpush1.msra.mxu0 0.0
        %2129 = vmatprep.subr.mxu0 0.0
        %2130 = vmatpush1.msra.mxu0 0.0
        %2131 = vmatprep.subr.mxu0 0.0
        %2132 = vmatpush1.msra.mxu0 0.0
        %2133 = vmatprep.subr.mxu0 0.0
        %2134 = vmatpush1.msra.mxu0 0.0
        %2135 = vmatprep.subr.mxu0 0.0
        %2136 = vmatpush1.msra.mxu0 0.0
        %2137 = vmatprep.subr.mxu0 0.0
        %2138 = vmatpush1.msra.mxu0 0.0
        %2139 = vmatprep.subr.mxu0 0.0
        %2140 = vmatpush1.msra.mxu0 0.0
        %2141 = vmatprep.subr.mxu0 0.0
        %2142 = vmatpush1.msra.mxu0 0.0
        %2143 = vmatprep.subr.mxu0 0.0
        %2144 = vmatpush1.msra.mxu0 0.0
        %2145 = vmatprep.subr.mxu0 0.0
        %2146 = vmatpush1.msra.mxu0 0.0
        %2147 = vmatprep.subr.mxu0 0.0
        %2148 = vmatpush1.msra.mxu0 0.0
        %2149 = vmatprep.subr.mxu0 0.0
        %2150 = vmatpush1.msra.mxu0 0.0
        %2151 = vmatprep.subr.mxu0 0.0
        %2152 = vmatpush1.msra.mxu0 0.0
        %2153 = vmatprep.subr.mxu0 0.0
        %2154 = vmatpush1.msra.mxu0 0.0
        %2155 = vmatprep.subr.mxu0 0.0
        %2156 = vmatpush1.msra.mxu0 0.0
        %2157 = vmatprep.mubr.f32.mxu0 0.0
        %2158 = vmatmul.mubr.f32.gmra.mrb[0].mxu0 %v2091
        %v2159 = vpop.f32.mrb[0].mxu0
        %v2160 = vadd.f32 0.0, %v2159
        %v2161 = vpop.f32.mrb[0].mxu0
        %2162 = vdwg.mxu0
        %v2164 = vsel %vm479, %v1865, 0
        %2166 = vmatprep.subr.mxu0 0.0
        %2167 = vmatpush1.msra.mxu0 %v2087
        %2168 = vmatprep.subr.mxu0 0.0
        %2169 = vmatpush1.msra.mxu0 0.0
        %2170 = vmatprep.subr.mxu0 0.0
        %2171 = vmatpush1.msra.mxu0 0.0
        %2172 = vmatprep.subr.mxu0 0.0
        %2173 = vmatpush1.msra.mxu0 0.0
        %2174 = vmatprep.subr.mxu0 0.0
        %2175 = vmatpush1.msra.mxu0 0.0
        %2176 = vmatprep.subr.mxu0 0.0
        %2177 = vmatpush1.msra.mxu0 0.0
        %2178 = vmatprep.subr.mxu0 0.0
        %2179 = vmatpush1.msra.mxu0 0.0
        %2180 = vmatprep.subr.mxu0 0.0
        %2181 = vmatpush1.msra.mxu0 0.0
        %2182 = vmatprep.subr.mxu0 0.0
        %2183 = vmatpush1.msra.mxu0 0.0
        %2184 = vmatprep.subr.mxu0 0.0
        %2185 = vmatpush1.msra.mxu0 0.0
        %2186 = vmatprep.subr.mxu0 0.0
        %2187 = vmatpush1.msra.mxu0 0.0
        %2188 = vmatprep.subr.mxu0 0.0
        %2189 = vmatpush1.msra.mxu0 0.0
        %2190 = vmatprep.subr.mxu0 0.0
        %2191 = vmatpush1.msra.mxu0 0.0
        %2192 = vmatprep.subr.mxu0 0.0
        %2193 = vmatpush1.msra.mxu0 0.0
        %2194 = vmatprep.subr.mxu0 0.0
        %2195 = vmatpush1.msra.mxu0 0.0
        %2196 = vmatprep.subr.mxu0 0.0
        %2197 = vmatpush1.msra.mxu0 0.0
        %2198 = vmatprep.subr.mxu0 0.0
        %2199 = vmatpush1.msra.mxu0 0.0
        %2200 = vmatprep.subr.mxu0 0.0
        %2201 = vmatpush1.msra.mxu0 0.0
        %2202 = vmatprep.subr.mxu0 0.0
        %2203 = vmatpush1.msra.mxu0 0.0
        %2204 = vmatprep.subr.mxu0 0.0
        %2205 = vmatpush1.msra.mxu0 0.0
        %2206 = vmatprep.subr.mxu0 0.0
        %2207 = vmatpush1.msra.mxu0 0.0
        %2208 = vmatprep.subr.mxu0 0.0
        %2209 = vmatpush1.msra.mxu0 0.0
        %2210 = vmatprep.subr.mxu0 0.0
        %2211 = vmatpush1.msra.mxu0 0.0
        %2212 = vmatprep.subr.mxu0 0.0
        %2213 = vmatpush1.msra.mxu0 0.0
        %2214 = vmatprep.subr.mxu0 0.0
        %2215 = vmatpush1.msra.mxu0 0.0
        %2216 = vmatprep.subr.mxu0 0.0
        %2217 = vmatpush1.msra.mxu0 0.0
        %2218 = vmatprep.subr.mxu0 0.0
        %2219 = vmatpush1.msra.mxu0 0.0
        %2220 = vmatprep.subr.mxu0 0.0
        %2221 = vmatpush1.msra.mxu0 0.0
        %2222 = vmatprep.subr.mxu0 0.0
        %2223 = vmatpush1.msra.mxu0 0.0
        %2224 = vmatprep.subr.mxu0 0.0
        %2225 = vmatpush1.msra.mxu0 0.0
        %2226 = vmatprep.subr.mxu0 0.0
        %2227 = vmatpush1.msra.mxu0 0.0
        %2228 = vmatprep.subr.mxu0 0.0
        %2229 = vmatpush1.msra.mxu0 0.0
        %2230 = vmatprep.mubr.f32.mxu0 0.0
        %2231 = vmatmul.mubr.f32.gmra.mrb[0].mxu0 %v2164
        %v2232 = vpop.f32.mrb[0].mxu0
        %v2233 = vadd.f32 %v2160, %v2232
        %v2234 = vpop.f32.mrb[0].mxu0
        %2235 = vdwg.mxu0
        %s2236 = scalar_lea.vmem %s6, 16
        %v2237 = vld [vmem:[%s2236] sm:$0xff]
        %v2239 = vsel %vm479, %v2011, 0
        %2241 = vmatprep.subr.mxu0 0.0
        %2242 = vmatpush1.msra.mxu0 %v2237
        %2243 = vmatprep.subr.mxu0 0.0
        %2244 = vmatpush1.msra.mxu0 0.0
        %2245 = vmatprep.subr.mxu0 0.0
        %2246 = vmatpush1.msra.mxu0 0.0
        %2247 = vmatprep.subr.mxu0 0.0
        %2248 = vmatpush1.msra.mxu0 0.0
        %2249 = vmatprep.subr.mxu0 0.0
        %2250 = vmatpush1.msra.mxu0 0.0
        %2251 = vmatprep.subr.mxu0 0.0
        %2252 = vmatpush1.msra.mxu0 0.0
        %2253 = vmatprep.subr.mxu0 0.0
        %2254 = vmatpush1.msra.mxu0 0.0
        %2255 = vmatprep.subr.mxu0 0.0
        %2256 = vmatpush1.msra.mxu0 0.0
        %2257 = vmatprep.subr.mxu0 0.0
        %2258 = vmatpush1.msra.mxu0 0.0
        %2259 = vmatprep.subr.mxu0 0.0
        %2260 = vmatpush1.msra.mxu0 0.0
        %2261 = vmatprep.subr.mxu0 0.0
        %2262 = vmatpush1.msra.mxu0 0.0
        %2263 = vmatprep.subr.mxu0 0.0
        %2264 = vmatpush1.msra.mxu0 0.0
        %2265 = vmatprep.subr.mxu0 0.0
        %2266 = vmatpush1.msra.mxu0 0.0
        %2267 = vmatprep.subr.mxu0 0.0
        %2268 = vmatpush1.msra.mxu0 0.0
        %2269 = vmatprep.subr.mxu0 0.0
        %2270 = vmatpush1.msra.mxu0 0.0
        %2271 = vmatprep.subr.mxu0 0.0
        %2272 = vmatpush1.msra.mxu0 0.0
        %2273 = vmatprep.subr.mxu0 0.0
        %2274 = vmatpush1.msra.mxu0 0.0
        %2275 = vmatprep.subr.mxu0 0.0
        %2276 = vmatpush1.msra.mxu0 0.0
        %2277 = vmatprep.subr.mxu0 0.0
        %2278 = vmatpush1.msra.mxu0 0.0
        %2279 = vmatprep.subr.mxu0 0.0
        %2280 = vmatpush1.msra.mxu0 0.0
        %2281 = vmatprep.subr.mxu0 0.0
        %2282 = vmatpush1.msra.mxu0 0.0
        %2283 = vmatprep.subr.mxu0 0.0
        %2284 = vmatpush1.msra.mxu0 0.0
        %2285 = vmatprep.subr.mxu0 0.0
        %2286 = vmatpush1.msra.mxu0 0.0
        %2287 = vmatprep.subr.mxu0 0.0
        %2288 = vmatpush1.msra.mxu0 0.0
        %2289 = vmatprep.subr.mxu0 0.0
        %2290 = vmatpush1.msra.mxu0 0.0
        %2291 = vmatprep.subr.mxu0 0.0
        %2292 = vmatpush1.msra.mxu0 0.0
        %2293 = vmatprep.subr.mxu0 0.0
        %2294 = vmatpush1.msra.mxu0 0.0
        %2295 = vmatprep.subr.mxu0 0.0
        %2296 = vmatpush1.msra.mxu0 0.0
        %2297 = vmatprep.subr.mxu0 0.0
        %2298 = vmatpush1.msra.mxu0 0.0
        %2299 = vmatprep.subr.mxu0 0.0
        %2300 = vmatpush1.msra.mxu0 0.0
        %2301 = vmatprep.subr.mxu0 0.0
        %2302 = vmatpush1.msra.mxu0 0.0
        %2303 = vmatprep.subr.mxu0 0.0
        %2304 = vmatpush1.msra.mxu0 0.0
        %2305 = vmatprep.mubr.f32.mxu0 0.0
        %2306 = vmatmul.mubr.f32.gmra.mrb[0].mxu0 %v2239
        %v2307 = vpop.f32.mrb[0].mxu0
        %v2308 = vadd.f32 0.0, %v2307
        %v2309 = vpop.f32.mrb[0].mxu0
        %2310 = vdwg.mxu0
        %v2311 = vadd.f32 %v2233, %v2308
        %s2312 = scalar_lea.vmem %s6, 24
        %v2313 = vld [vmem:[%s2312] sm:$0xff]
        %v2315 = vsel %vm479, %v2084, 0
        %2317 = vmatprep.subr.mxu0 0.0
        %2318 = vmatpush1.msra.mxu0 %v2313
        %2319 = vmatprep.subr.mxu0 0.0
        %2320 = vmatpush1.msra.mxu0 0.0
        %2321 = vmatprep.subr.mxu0 0.0
        %2322 = vmatpush1.msra.mxu0 0.0
        %2323 = vmatprep.subr.mxu0 0.0
        %2324 = vmatpush1.msra.mxu0 0.0
        %2325 = vmatprep.subr.mxu0 0.0
        %2326 = vmatpush1.msra.mxu0 0.0
        %2327 = vmatprep.subr.mxu0 0.0
        %2328 = vmatpush1.msra.mxu0 0.0
        %2329 = vmatprep.subr.mxu0 0.0
        %2330 = vmatpush1.msra.mxu0 0.0
        %2331 = vmatprep.subr.mxu0 0.0
        %2332 = vmatpush1.msra.mxu0 0.0
        %2333 = vmatprep.subr.mxu0 0.0
        %2334 = vmatpush1.msra.mxu0 0.0
        %2335 = vmatprep.subr.mxu0 0.0
        %2336 = vmatpush1.msra.mxu0 0.0
        %2337 = vmatprep.subr.mxu0 0.0
        %2338 = vmatpush1.msra.mxu0 0.0
        %2339 = vmatprep.subr.mxu0 0.0
        %2340 = vmatpush1.msra.mxu0 0.0
        %2341 = vmatprep.subr.mxu0 0.0
        %2342 = vmatpush1.msra.mxu0 0.0
        %2343 = vmatprep.subr.mxu0 0.0
        %2344 = vmatpush1.msra.mxu0 0.0
        %2345 = vmatprep.subr.mxu0 0.0
        %2346 = vmatpush1.msra.mxu0 0.0
        %2347 = vmatprep.subr.mxu0 0.0
        %2348 = vmatpush1.msra.mxu0 0.0
        %2349 = vmatprep.subr.mxu0 0.0
        %2350 = vmatpush1.msra.mxu0 0.0
        %2351 = vmatprep.subr.mxu0 0.0
        %2352 = vmatpush1.msra.mxu0 0.0
        %2353 = vmatprep.subr.mxu0 0.0
        %2354 = vmatpush1.msra.mxu0 0.0
        %2355 = vmatprep.subr.mxu0 0.0
        %2356 = vmatpush1.msra.mxu0 0.0
        %2357 = vmatprep.subr.mxu0 0.0
        %2358 = vmatpush1.msra.mxu0 0.0
        %2359 = vmatprep.subr.mxu0 0.0
        %2360 = vmatpush1.msra.mxu0 0.0
        %2361 = vmatprep.subr.mxu0 0.0
        %2362 = vmatpush1.msra.mxu0 0.0
        %2363 = vmatprep.subr.mxu0 0.0
        %2364 = vmatpush1.msra.mxu0 0.0
        %2365 = vmatprep.subr.mxu0 0.0
        %2366 = vmatpush1.msra.mxu0 0.0
        %2367 = vmatprep.subr.mxu0 0.0
        %2368 = vmatpush1.msra.mxu0 0.0
        %2369 = vmatprep.subr.mxu0 0.0
        %2370 = vmatpush1.msra.mxu0 0.0
        %2371 = vmatprep.subr.mxu0 0.0
        %2372 = vmatpush1.msra.mxu0 0.0
        %2373 = vmatprep.subr.mxu0 0.0
        %2374 = vmatpush1.msra.mxu0 0.0
        %2375 = vmatprep.subr.mxu0 0.0
        %2376 = vmatpush1.msra.mxu0 0.0
        %2377 = vmatprep.subr.mxu0 0.0
        %2378 = vmatpush1.msra.mxu0 0.0
        %2379 = vmatprep.subr.mxu0 0.0
        %2380 = vmatpush1.msra.mxu0 0.0
        %2381 = vmatprep.mubr.f32.mxu0 0.0
        %2382 = vmatmul.mubr.f32.gmra.mrb[0].mxu0 %v2315
        %v2383 = vpop.f32.mrb[0].mxu0
        %v2384 = vadd.f32 0.0, %v2383
        %v2385 = vpop.f32.mrb[0].mxu0
        %2386 = vdwg.mxu0
        %v2387 = vadd.f32 %v2311, %v2384
        %v2388 = vld [vmem:[%s7] sm:$0x1]
        %v2390 = vlaneseq
        %v2391 = vshrl.u32 %v2390, 7
        %v2392 = vsub.s32 0, %v2391
        %v2393 = vrot.slane %v2388, %v2392
        %v2395 = vadd.f32 %v2387, %v2393
        %2396 = vst.msk [vmem:[%s366] sm:$0xff] %vm404, %v2395
        %s2397 = sand.u32 %s223, 1
        %s2398 = scalar_lea.sflag [#allocation6], %s2397
        %s2399 = sand.u32 %s223, 1
        %s2400 = smul.addr %s2399, 8
        %s2401 = scalar_lea.vmem [#allocation5], %s2400
        %s2402 = sand.u32 %s249, 1
        %s2403 = scalar_lea.sflag [#allocation8], %s2402
        %s2404 = sand.u32 %s249, 1
        %s2405 = smul.addr %s2404, 32
        %s2406 = scalar_lea.vmem [#allocation7], %s2405
        // Predicated region
        $region53: #{tpu_custom_call.1} parent=51 // pred_check
          %p2407 = pneg %p233
        $region54: #{tpu_custom_call.1} parent=51 // pred_check_branch
          %2409 = sbr.rel (%p2407) target = $region56
        $region55: #{tpu_custom_call.1} parent=51 // pred_region
          %s2411 = ssub.s32 128, 128
          %2412 = vsyncadd %s2398, %s2411
          %s2413 = smul.addr %s27, 128
          %s2414 = scalar_lea.hbm %s8, %s2413
          %s2416 = sshll.u32 %s2401, 4
          %s2417 = int_to_ptr.vmem [resolvable:$true] %s2416
          %2419 = dma.vmem_to_hbm [thread:$0]  %s2417, 128, %s2414, %s2398
        $region56: #{tpu_custom_call.1} parent=51 // pred_fallthru
          _
        // Predicated region
        $region57: #{tpu_custom_call.1} parent=51 // pred_check
          %p2420 = pneg %p259
        $region58: #{tpu_custom_call.1} parent=51 // pred_check_branch
          %2422 = sbr.rel (%p2420) target = $region60
        $region59: #{tpu_custom_call.1} parent=51 // pred_region
          %s2424 = ssub.s32 512, 512
          %2425 = vsyncadd %s2403, %s2424
          %s2426 = smul.addr %s27, 4
          %s2427 = smul.addr %s2426, 128
          %s2428 = scalar_lea.hbm %s9, %s2427
          %s2429 = sshll.u32 %s2406, 4
          %s2430 = int_to_ptr.vmem [resolvable:$true] %s2429
          %2435 = dma.vmem_to_hbm [thread:$0]  %s2430, 512, %s2428, %s2403, 128, 128, 8
        $region60: #{tpu_custom_call.1} parent=51 // pred_fallthru
          _
      $region52: #{tpu_custom_call.1} parent=5 // pred_fallthru
        _
      %p2436 = scmp.le.s32.totalorder 2, %s22
      // Predicated region
      $region61: #{tpu_custom_call.1} parent=5 // pred_check
        %p2437 = pneg %p2436
      $region62: #{tpu_custom_call.1} parent=5 // pred_check_branch
        %2439 = sbr.rel (%p2437) target = $region64
      $region63: #{tpu_custom_call.1} parent=5 // pred_region
        %s2440 = ssub.s32 %s22, 2
        // Predicated region
        $region65: #{tpu_custom_call.1} parent=63 // pred_check
          %p2441 = pneg %p239
        $region66: #{tpu_custom_call.1} parent=63 // pred_check_branch
          %2443 = sbr.rel (%p2441) target = $region68
        $region67: #{tpu_custom_call.1} parent=63 // pred_region
          %s2444 = sand.u32 %s224, 1
          %s2445 = scalar_lea.sflag [#allocation6], %s2444
          %s2446 = sand.u32 %s224, 1
          %s2447 = smul.addr %s2446, 8
          %s2448 = scalar_lea.vmem [#allocation5], %s2447
          %2449 = dma.done %s2445, 128
        $region68: #{tpu_custom_call.1} parent=63 // pred_fallthru
          _
        // Predicated region
        $region69: #{tpu_custom_call.1} parent=63 // pred_check
          %p2450 = pneg %p265
        $region70: #{tpu_custom_call.1} parent=63 // pred_check_branch
          %2452 = sbr.rel (%p2450) target = $region72
        $region71: #{tpu_custom_call.1} parent=63 // pred_region
          %s2453 = sand.u32 %s250, 1
          %s2454 = scalar_lea.sflag [#allocation8], %s2453
          %s2455 = sand.u32 %s250, 1
          %s2456 = smul.addr %s2455, 32
          %s2457 = scalar_lea.vmem [#allocation7], %s2456
          %2458 = dma.done %s2454, 512
        $region72: #{tpu_custom_call.1} parent=63 // pred_fallthru
          _
      $region64: #{tpu_custom_call.1} parent=5 // pred_fallthru
        _
    $region6: #{tpu_custom_call.1} parent=1 // loop_footer
      %s26 = sadd.s32 1, %s22
    $region7: #{tpu_custom_call.1} parent=1 // loop_footer_branch
      %21 = sbr.rel target = $region3
    $region8: #{tpu_custom_call.1} parent=1 // loop_exit
      _
    %2459 = vsyncpa [#allocation6], 1
    %s2460 = scalar_lea.sflag [#allocation6], 1
    %2461 = vsyncpa %s2460, 1
    %2462 = vsyncpa [#allocation8], 1
    %s2463 = scalar_lea.sflag [#allocation8], 1
    %2464 = vsyncpa %s2463, 1

</llo_original>
